<compile_context>
chip_gen: v6e
topology: v6e:2x2x1
jax: 0.10.0
libtpu: 0.0.40
codegen_flags: <defaults>
</compile_context>

<pallas_src>
import functools

import jax
import jax.numpy as jnp
from jax.experimental import pallas as pl
from jax.experimental.pallas import tpu as pltpu


def _blur_row_tile_kernel(w_ref, win_ref, o_ref, *, C_in, C_out, kH, kW,
                          TRO, OW, row_step, col_step):
    """One (batch, output-row-tile) grid step.

    w_ref:   SMEM (C_out*C_in*kH*kW,) f32 conv taps.
    win_ref: VMEM (1, C_in, 1, TR_in, Wk) reflection-padded, halo'd input window.
    o_ref:   VMEM (1, C_out, TRO, OW) output tile (final strided conv output).
    """
    accs = [jnp.zeros((TRO, OW), dtype=jnp.float32) for _ in range(C_out)]
    for ci in range(C_in):
        for kh in range(kH):
            # One contiguous (TRO, Wk) VMEM read per (ci, kh); f32 math is v5e-safe.
            rows = win_ref[0, ci, 0, pl.ds(kh * row_step, TRO), :].astype(jnp.float32)
            for kw in range(kW):
                c0 = kw * col_step
                slab = rows[:, c0:c0 + OW]                      # static lane slice
                for co in range(C_out):
                    w = w_ref[((co * C_in + ci) * kH + kh) * kW + kw]   # SMEM scalar tap
                    accs[co] = accs[co] + w * slab              # VPU MAC, acc in vregs
    for co in range(C_out):
        o_ref[0, co, :, :] = accs[co].astype(o_ref.dtype)


def gaussian_blur_layer_input_kernel(x, kernel_tensor, *, stride, pad):
    """Equivalent of: ReflectionPad2d(pad)(x) -> F.conv2d(., kernel_tensor, stride)."""
    N, C_in, H, W = x.shape
    C_out, C_in_w, kH, kW = kernel_tensor.shape
    assert C_in == C_in_w, "groups=1 conv: kernel in-channels must match x channels"

    if isinstance(stride, (tuple, list)):
        sh, sw = int(stride[0]), int(stride[1])
    else:
        sh = sw = int(stride)
    if isinstance(pad, (tuple, list)):
        pad_l, pad_r, pad_t, pad_b = (int(p) for p in pad)   # ReflectionPad2d order (l, r, t, b)
    else:
        pad_l = pad_r = pad_t = pad_b = int(pad)

    assert max(pad_t, pad_b) < H and max(pad_l, pad_r) < W, \
        "ReflectionPad2d requires pad < corresponding input dim"

    Hp = H + pad_t + pad_b
    Wp = W + pad_l + pad_r
    OH = (Hp - kH) // sh + 1
    OW = (Wp - kW) // sw + 1
    assert OH >= 1 and OW >= 1

    # Output-row tile: 8 rows (one f32 sublane group), or whole OH if smaller.
    TRO = 8 if OH >= 8 else OH
    R = pl.cdiv(OH, TRO)

    # --- glue: ONE gather builds reflection-padded, halo'd, stride-aware row windows
    # (N, C_in, R, TR_in, Wk). For stride 1 that is just padded rows with a kH-1 halo;
    # for stride > 1 rows/cols are laid out kh-/kw-grouped so the kernel only ever does
    # contiguous static slices. ---
    def _reflect(q, n):   # PyTorch-style reflection (edge not repeated), valid for pad < n
        q = jnp.abs(q)
        return jnp.where(q > n - 1, 2 * (n - 1) - q, q)

    r_ids = jnp.arange(R, dtype=jnp.int32)
    if sh == 1:
        TR_in = TRO + kH - 1
        row_step = 1
        t_ids = jnp.arange(TR_in, dtype=jnp.int32)
        p_rows = r_ids[:, None] * TRO + t_ids[None, :]                      # (R, TR_in)
    else:
        TR_in = kH * TRO
        row_step = TRO
        kh_ids = jnp.arange(kH, dtype=jnp.int32)
        i_ids = jnp.arange(TRO, dtype=jnp.int32)
        tile_rows = (kh_ids[:, None] + i_ids[None, :] * sh).reshape(-1)     # (kH*TRO,)
        p_rows = r_ids[:, None] * (TRO * sh) + tile_rows[None, :]
    p_rows = jnp.clip(p_rows, 0, Hp - 1)          # clamp for the partial last tile only
    src_rows = _reflect(p_rows - pad_t, H)        # (R, TR_in) rows into x

    if sw == 1:
        Wk = Wp
        col_step = 1
        p_cols = jnp.arange(Wp, dtype=jnp.int32)
    else:
        Wk = kW * OW
        col_step = OW
        kw_ids = jnp.arange(kW, dtype=jnp.int32)
        j_ids = jnp.arange(OW, dtype=jnp.int32)
        p_cols = (kw_ids[:, None] + j_ids[None, :] * sw).reshape(-1)        # (kW*OW,)
    src_cols = _reflect(p_cols - pad_l, W)        # (Wk,) cols into x

    win = jnp.take(x, src_cols, axis=3)           # (N, C_in, H, Wk), input dtype kept
    win = jnp.take(win, src_rows, axis=2)         # (N, C_in, R, TR_in, Wk)

    # Taps stay f32 in SMEM regardless of x dtype (no bf16 quantization of the kernel).
    w_flat = kernel_tensor.astype(jnp.float32).reshape(-1)

    kernel = functools.partial(
        _blur_row_tile_kernel, C_in=C_in, C_out=C_out, kH=kH, kW=kW,
        TRO=TRO, OW=OW, row_step=row_step, col_step=col_step)

    out = pl.pallas_call(
        kernel,
        out_shape=jax.ShapeDtypeStruct((N, C_out, OH, OW), x.dtype),
        grid=(N, R),
        in_specs=[
            pl.BlockSpec(memory_space=pltpu.MemorySpace.SMEM),                   # taps
            pl.BlockSpec((1, C_in, 1, TR_in, Wk), lambda n, r: (n, 0, r, 0, 0)),  # window
        ],
        out_specs=pl.BlockSpec((1, C_out, TRO, OW), lambda n, r: (n, 0, r, 0)),
        compiler_params=pltpu.CompilerParams(
            dimension_semantics=("parallel", "parallel"),
            vmem_limit_bytes=32 * 1024 * 1024,   # tiles are tiny; well under v7x's 64 MiB
        ),
    )(w_flat, win)
    return out


def _make_gaussian_kernel_tensor(channels, ksize=3, sigma=1.0, dtype=jnp.float32):
    """Deterministic per-channel Gaussian blur weights, shape (C, C, k, k)."""
    r = jnp.arange(ksize, dtype=dtype) - (ksize - 1) / 2.0
    g1 = jnp.exp(-(r ** 2) / (2.0 * sigma ** 2))
    g2 = jnp.outer(g1, g1)
    g2 = g2 / jnp.sum(g2)
    eye = jnp.eye(channels, dtype=dtype)
    return eye[:, :, None, None] * g2[None, None, :, :]   # (C, C, k, k)


if __name__ == "__main__":
    key = jax.random.PRNGKey(0)
    N, C, H, W = 2, 4, 16, 16
    stride, pad = 1, 1

    x = jax.random.normal(key, (N, C, H, W), dtype=jnp.float32)
    kernel_tensor = _make_gaussian_kernel_tensor(C, ksize=3, sigma=1.0)

    out = gaussian_blur_layer_input_kernel(x, kernel_tensor, stride=stride, pad=pad)
    out = jax.block_until_ready(out)

    # Reference check (XLA conv on the same reflection-padded input).
    x_pad_ref = jnp.pad(x, ((0, 0), (0, 0), (pad, pad), (pad, pad)), mode="reflect")
    ref = jax.lax.conv_general_dilated(
        x_pad_ref, kernel_tensor,
        window_strides=(stride, stride), padding="VALID",
        dimension_numbers=("NCHW", "OIHW", "NCHW"),
    )
    assert out.shape == ref.shape, (out.shape, ref.shape)
    err = float(jnp.max(jnp.abs(out - ref)))
    assert jnp.allclose(out, ref, rtol=1e-5, atol=1e-5), err

    print("KERNEL_OK")
</pallas_src>

<mosaic_0001>
module attributes {stable_mosaic.version = 11 : i64} {
  func.func @_blur_row_tile_kernel(%arg0: i32, %arg1: i32, %arg2: memref<144xf32, #tpu.memory_space<smem>>, %arg3: memref<1x4x1x10x18xf32, #tpu.memory_space<vmem>>, %arg4: memref<1x4x8x16xf32, #tpu.memory_space<vmem>>) attributes {dimension_semantics = [#tpu.dimension_semantics<parallel>, #tpu.dimension_semantics<parallel>], iteration_bounds = array<i64: 2, 2>, scalar_prefetch = 0 : i64, scratch_operands = 0 : i64, tpu.core_type = #tpu.core_type<tc>, window_params = [{transform_indices = @transform_0, window_bounds = array<i64: 144>}, {transform_indices = @transform_1, window_bounds = array<i64: 1, 4, 1, 10, 18>}, {transform_indices = @transform_2, window_bounds = array<i64: 1, 4, 8, 16>}]} {
    %cst = arith.constant 0.000000e+00 : f32
    %0 = vector.broadcast %cst : f32 to vector<8x16xf32>
    %cst_0 = arith.constant 0.000000e+00 : f32
    %1 = vector.broadcast %cst_0 : f32 to vector<8x16xf32>
    %cst_1 = arith.constant 0.000000e+00 : f32
    %2 = vector.broadcast %cst_1 : f32 to vector<8x16xf32>
    %cst_2 = arith.constant 0.000000e+00 : f32
    %3 = vector.broadcast %cst_2 : f32 to vector<8x16xf32>
    %c0 = arith.constant 0 : index
    %c0_3 = arith.constant 0 : index
    %c0_4 = arith.constant 0 : index
    %c0_5 = arith.constant 0 : index
    %c0_6 = arith.constant 0 : index
    %4 = vector.load %arg3[%c0, %c0_3, %c0_4, %c0_5, %c0_6] : memref<1x4x1x10x18xf32, #tpu.memory_space<vmem>>, vector<1x1x1x8x18xf32>
    %5 = vector.shape_cast %4 : vector<1x1x1x8x18xf32> to vector<8x18xf32>
    %6 = vector.extract_strided_slice %5 {offsets = [0, 0], sizes = [8, 16], strides = [1, 1]} : vector<8x18xf32> to vector<8x16xf32>
    %c0_7 = arith.constant 0 : index
    %7 = memref.load %arg2[%c0_7] : memref<144xf32, #tpu.memory_space<smem>>
    %8 = vector.broadcast %7 : f32 to vector<8x16xf32>
    %9 = arith.mulf %8, %6 : vector<8x16xf32>
    %10 = arith.addf %0, %9 : vector<8x16xf32>
    %c36 = arith.constant 36 : index
    %11 = memref.load %arg2[%c36] : memref<144xf32, #tpu.memory_space<smem>>
    %12 = vector.broadcast %11 : f32 to vector<8x16xf32>
    %13 = arith.mulf %12, %6 : vector<8x16xf32>
    %14 = arith.addf %1, %13 : vector<8x16xf32>
    %c72 = arith.constant 72 : index
    %15 = memref.load %arg2[%c72] : memref<144xf32, #tpu.memory_space<smem>>
    %16 = vector.broadcast %15 : f32 to vector<8x16xf32>
    %17 = arith.mulf %16, %6 : vector<8x16xf32>
    %18 = arith.addf %2, %17 : vector<8x16xf32>
    %c108 = arith.constant 108 : index
    %19 = memref.load %arg2[%c108] : memref<144xf32, #tpu.memory_space<smem>>
    %20 = vector.broadcast %19 : f32 to vector<8x16xf32>
    %21 = arith.mulf %20, %6 : vector<8x16xf32>
    %22 = arith.addf %3, %21 : vector<8x16xf32>
    %23 = vector.extract_strided_slice %5 {offsets = [0, 1], sizes = [8, 16], strides = [1, 1]} : vector<8x18xf32> to vector<8x16xf32>
    %c1 = arith.constant 1 : index
    %24 = memref.load %arg2[%c1] : memref<144xf32, #tpu.memory_space<smem>>
    %25 = vector.broadcast %24 : f32 to vector<8x16xf32>
    %26 = arith.mulf %25, %23 : vector<8x16xf32>
    %27 = arith.addf %10, %26 : vector<8x16xf32>
    %c37 = arith.constant 37 : index
    %28 = memref.load %arg2[%c37] : memref<144xf32, #tpu.memory_space<smem>>
    %29 = vector.broadcast %28 : f32 to vector<8x16xf32>
    %30 = arith.mulf %29, %23 : vector<8x16xf32>
    %31 = arith.addf %14, %30 : vector<8x16xf32>
    %c73 = arith.constant 73 : index
    %32 = memref.load %arg2[%c73] : memref<144xf32, #tpu.memory_space<smem>>
    %33 = vector.broadcast %32 : f32 to vector<8x16xf32>
    %34 = arith.mulf %33, %23 : vector<8x16xf32>
    %35 = arith.addf %18, %34 : vector<8x16xf32>
    %c109 = arith.constant 109 : index
    %36 = memref.load %arg2[%c109] : memref<144xf32, #tpu.memory_space<smem>>
    %37 = vector.broadcast %36 : f32 to vector<8x16xf32>
    %38 = arith.mulf %37, %23 : vector<8x16xf32>
    %39 = arith.addf %22, %38 : vector<8x16xf32>
    %40 = vector.extract_strided_slice %5 {offsets = [0, 2], sizes = [8, 16], strides = [1, 1]} : vector<8x18xf32> to vector<8x16xf32>
    %c2 = arith.constant 2 : index
    %41 = memref.load %arg2[%c2] : memref<144xf32, #tpu.memory_space<smem>>
    %42 = vector.broadcast %41 : f32 to vector<8x16xf32>
    %43 = arith.mulf %42, %40 : vector<8x16xf32>
    %44 = arith.addf %27, %43 : vector<8x16xf32>
    %c38 = arith.constant 38 : index
    %45 = memref.load %arg2[%c38] : memref<144xf32, #tpu.memory_space<smem>>
    %46 = vector.broadcast %45 : f32 to vector<8x16xf32>
    %47 = arith.mulf %46, %40 : vector<8x16xf32>
    %48 = arith.addf %31, %47 : vector<8x16xf32>
    %c74 = arith.constant 74 : index
    %49 = memref.load %arg2[%c74] : memref<144xf32, #tpu.memory_space<smem>>
    %50 = vector.broadcast %49 : f32 to vector<8x16xf32>
    %51 = arith.mulf %50, %40 : vector<8x16xf32>
    %52 = arith.addf %35, %51 : vector<8x16xf32>
    %c110 = arith.constant 110 : index
    %53 = memref.load %arg2[%c110] : memref<144xf32, #tpu.memory_space<smem>>
    %54 = vector.broadcast %53 : f32 to vector<8x16xf32>
    %55 = arith.mulf %54, %40 : vector<8x16xf32>
    %56 = arith.addf %39, %55 : vector<8x16xf32>
    %c0_8 = arith.constant 0 : index
    %c0_9 = arith.constant 0 : index
    %c0_10 = arith.constant 0 : index
    %c1_11 = arith.constant 1 : index
    %c0_12 = arith.constant 0 : index
    %57 = vector.load %arg3[%c0_8, %c0_9, %c0_10, %c1_11, %c0_12] : memref<1x4x1x10x18xf32, #tpu.memory_space<vmem>>, vector<1x1x1x8x18xf32>
    %58 = vector.shape_cast %57 : vector<1x1x1x8x18xf32> to vector<8x18xf32>
    %59 = vector.extract_strided_slice %58 {offsets = [0, 0], sizes = [8, 16], strides = [1, 1]} : vector<8x18xf32> to vector<8x16xf32>
    %c3 = arith.constant 3 : index
    %60 = memref.load %arg2[%c3] : memref<144xf32, #tpu.memory_space<smem>>
    %61 = vector.broadcast %60 : f32 to vector<8x16xf32>
    %62 = arith.mulf %61, %59 : vector<8x16xf32>
    %63 = arith.addf %44, %62 : vector<8x16xf32>
    %c39 = arith.constant 39 : index
    %64 = memref.load %arg2[%c39] : memref<144xf32, #tpu.memory_space<smem>>
    %65 = vector.broadcast %64 : f32 to vector<8x16xf32>
    %66 = arith.mulf %65, %59 : vector<8x16xf32>
    %67 = arith.addf %48, %66 : vector<8x16xf32>
    %c75 = arith.constant 75 : index
    %68 = memref.load %arg2[%c75] : memref<144xf32, #tpu.memory_space<smem>>
    %69 = vector.broadcast %68 : f32 to vector<8x16xf32>
    %70 = arith.mulf %69, %59 : vector<8x16xf32>
    %71 = arith.addf %52, %70 : vector<8x16xf32>
    %c111 = arith.constant 111 : index
    %72 = memref.load %arg2[%c111] : memref<144xf32, #tpu.memory_space<smem>>
    %73 = vector.broadcast %72 : f32 to vector<8x16xf32>
    %74 = arith.mulf %73, %59 : vector<8x16xf32>
    %75 = arith.addf %56, %74 : vector<8x16xf32>
    %76 = vector.extract_strided_slice %58 {offsets = [0, 1], sizes = [8, 16], strides = [1, 1]} : vector<8x18xf32> to vector<8x16xf32>
    %c4 = arith.constant 4 : index
    %77 = memref.load %arg2[%c4] : memref<144xf32, #tpu.memory_space<smem>>
    %78 = vector.broadcast %77 : f32 to vector<8x16xf32>
    %79 = arith.mulf %78, %76 : vector<8x16xf32>
    %80 = arith.addf %63, %79 : vector<8x16xf32>
    %c40 = arith.constant 40 : index
    %81 = memref.load %arg2[%c40] : memref<144xf32, #tpu.memory_space<smem>>
    %82 = vector.broadcast %81 : f32 to vector<8x16xf32>
    %83 = arith.mulf %82, %76 : vector<8x16xf32>
    %84 = arith.addf %67, %83 : vector<8x16xf32>
    %c76 = arith.constant 76 : index
    %85 = memref.load %arg2[%c76] : memref<144xf32, #tpu.memory_space<smem>>
    %86 = vector.broadcast %85 : f32 to vector<8x16xf32>
    %87 = arith.mulf %86, %76 : vector<8x16xf32>
    %88 = arith.addf %71, %87 : vector<8x16xf32>
    %c112 = arith.constant 112 : index
    %89 = memref.load %arg2[%c112] : memref<144xf32, #tpu.memory_space<smem>>
    %90 = vector.broadcast %89 : f32 to vector<8x16xf32>
    %91 = arith.mulf %90, %76 : vector<8x16xf32>
    %92 = arith.addf %75, %91 : vector<8x16xf32>
    %93 = vector.extract_strided_slice %58 {offsets = [0, 2], sizes = [8, 16], strides = [1, 1]} : vector<8x18xf32> to vector<8x16xf32>
    %c5 = arith.constant 5 : index
    %94 = memref.load %arg2[%c5] : memref<144xf32, #tpu.memory_space<smem>>
    %95 = vector.broadcast %94 : f32 to vector<8x16xf32>
    %96 = arith.mulf %95, %93 : vector<8x16xf32>
    %97 = arith.addf %80, %96 : vector<8x16xf32>
    %c41 = arith.constant 41 : index
    %98 = memref.load %arg2[%c41] : memref<144xf32, #tpu.memory_space<smem>>
    %99 = vector.broadcast %98 : f32 to vector<8x16xf32>
    %100 = arith.mulf %99, %93 : vector<8x16xf32>
    %101 = arith.addf %84, %100 : vector<8x16xf32>
    %c77 = arith.constant 77 : index
    %102 = memref.load %arg2[%c77] : memref<144xf32, #tpu.memory_space<smem>>
    %103 = vector.broadcast %102 : f32 to vector<8x16xf32>
    %104 = arith.mulf %103, %93 : vector<8x16xf32>
    %105 = arith.addf %88, %104 : vector<8x16xf32>
    %c113 = arith.constant 113 : index
    %106 = memref.load %arg2[%c113] : memref<144xf32, #tpu.memory_space<smem>>
    %107 = vector.broadcast %106 : f32 to vector<8x16xf32>
    %108 = arith.mulf %107, %93 : vector<8x16xf32>
    %109 = arith.addf %92, %108 : vector<8x16xf32>
    %c0_13 = arith.constant 0 : index
    %c0_14 = arith.constant 0 : index
    %c0_15 = arith.constant 0 : index
    %c2_16 = arith.constant 2 : index
    %c0_17 = arith.constant 0 : index
    %110 = vector.load %arg3[%c0_13, %c0_14, %c0_15, %c2_16, %c0_17] : memref<1x4x1x10x18xf32, #tpu.memory_space<vmem>>, vector<1x1x1x8x18xf32>
    %111 = vector.shape_cast %110 : vector<1x1x1x8x18xf32> to vector<8x18xf32>
    %112 = vector.extract_strided_slice %111 {offsets = [0, 0], sizes = [8, 16], strides = [1, 1]} : vector<8x18xf32> to vector<8x16xf32>
    %c6 = arith.constant 6 : index
    %113 = memref.load %arg2[%c6] : memref<144xf32, #tpu.memory_space<smem>>
    %114 = vector.broadcast %113 : f32 to vector<8x16xf32>
    %115 = arith.mulf %114, %112 : vector<8x16xf32>
    %116 = arith.addf %97, %115 : vector<8x16xf32>
    %c42 = arith.constant 42 : index
    %117 = memref.load %arg2[%c42] : memref<144xf32, #tpu.memory_space<smem>>
    %118 = vector.broadcast %117 : f32 to vector<8x16xf32>
    %119 = arith.mulf %118, %112 : vector<8x16xf32>
    %120 = arith.addf %101, %119 : vector<8x16xf32>
    %c78 = arith.constant 78 : index
    %121 = memref.load %arg2[%c78] : memref<144xf32, #tpu.memory_space<smem>>
    %122 = vector.broadcast %121 : f32 to vector<8x16xf32>
    %123 = arith.mulf %122, %112 : vector<8x16xf32>
    %124 = arith.addf %105, %123 : vector<8x16xf32>
    %c114 = arith.constant 114 : index
    %125 = memref.load %arg2[%c114] : memref<144xf32, #tpu.memory_space<smem>>
    %126 = vector.broadcast %125 : f32 to vector<8x16xf32>
    %127 = arith.mulf %126, %112 : vector<8x16xf32>
    %128 = arith.addf %109, %127 : vector<8x16xf32>
    %129 = vector.extract_strided_slice %111 {offsets = [0, 1], sizes = [8, 16], strides = [1, 1]} : vector<8x18xf32> to vector<8x16xf32>
    %c7 = arith.constant 7 : index
    %130 = memref.load %arg2[%c7] : memref<144xf32, #tpu.memory_space<smem>>
    %131 = vector.broadcast %130 : f32 to vector<8x16xf32>
    %132 = arith.mulf %131, %129 : vector<8x16xf32>
    %133 = arith.addf %116, %132 : vector<8x16xf32>
    %c43 = arith.constant 43 : index
    %134 = memref.load %arg2[%c43] : memref<144xf32, #tpu.memory_space<smem>>
    %135 = vector.broadcast %134 : f32 to vector<8x16xf32>
    %136 = arith.mulf %135, %129 : vector<8x16xf32>
    %137 = arith.addf %120, %136 : vector<8x16xf32>
    %c79 = arith.constant 79 : index
    %138 = memref.load %arg2[%c79] : memref<144xf32, #tpu.memory_space<smem>>
    %139 = vector.broadcast %138 : f32 to vector<8x16xf32>
    %140 = arith.mulf %139, %129 : vector<8x16xf32>
    %141 = arith.addf %124, %140 : vector<8x16xf32>
    %c115 = arith.constant 115 : index
    %142 = memref.load %arg2[%c115] : memref<144xf32, #tpu.memory_space<smem>>
    %143 = vector.broadcast %142 : f32 to vector<8x16xf32>
    %144 = arith.mulf %143, %129 : vector<8x16xf32>
    %145 = arith.addf %128, %144 : vector<8x16xf32>
    %146 = vector.extract_strided_slice %111 {offsets = [0, 2], sizes = [8, 16], strides = [1, 1]} : vector<8x18xf32> to vector<8x16xf32>
    %c8 = arith.constant 8 : index
    %147 = memref.load %arg2[%c8] : memref<144xf32, #tpu.memory_space<smem>>
    %148 = vector.broadcast %147 : f32 to vector<8x16xf32>
    %149 = arith.mulf %148, %146 : vector<8x16xf32>
    %150 = arith.addf %133, %149 : vector<8x16xf32>
    %c44 = arith.constant 44 : index
    %151 = memref.load %arg2[%c44] : memref<144xf32, #tpu.memory_space<smem>>
    %152 = vector.broadcast %151 : f32 to vector<8x16xf32>
    %153 = arith.mulf %152, %146 : vector<8x16xf32>
    %154 = arith.addf %137, %153 : vector<8x16xf32>
    %c80 = arith.constant 80 : index
    %155 = memref.load %arg2[%c80] : memref<144xf32, #tpu.memory_space<smem>>
    %156 = vector.broadcast %155 : f32 to vector<8x16xf32>
    %157 = arith.mulf %156, %146 : vector<8x16xf32>
    %158 = arith.addf %141, %157 : vector<8x16xf32>
    %c116 = arith.constant 116 : index
    %159 = memref.load %arg2[%c116] : memref<144xf32, #tpu.memory_space<smem>>
    %160 = vector.broadcast %159 : f32 to vector<8x16xf32>
    %161 = arith.mulf %160, %146 : vector<8x16xf32>
    %162 = arith.addf %145, %161 : vector<8x16xf32>
    %c0_18 = arith.constant 0 : index
    %c1_19 = arith.constant 1 : index
    %c0_20 = arith.constant 0 : index
    %c0_21 = arith.constant 0 : index
    %c0_22 = arith.constant 0 : index
    %163 = vector.load %arg3[%c0_18, %c1_19, %c0_20, %c0_21, %c0_22] : memref<1x4x1x10x18xf32, #tpu.memory_space<vmem>>, vector<1x1x1x8x18xf32>
    %164 = vector.shape_cast %163 : vector<1x1x1x8x18xf32> to vector<8x18xf32>
    %165 = vector.extract_strided_slice %164 {offsets = [0, 0], sizes = [8, 16], strides = [1, 1]} : vector<8x18xf32> to vector<8x16xf32>
    %c9 = arith.constant 9 : index
    %166 = memref.load %arg2[%c9] : memref<144xf32, #tpu.memory_space<smem>>
    %167 = vector.broadcast %166 : f32 to vector<8x16xf32>
    %168 = arith.mulf %167, %165 : vector<8x16xf32>
    %169 = arith.addf %150, %168 : vector<8x16xf32>
    %c45 = arith.constant 45 : index
    %170 = memref.load %arg2[%c45] : memref<144xf32, #tpu.memory_space<smem>>
    %171 = vector.broadcast %170 : f32 to vector<8x16xf32>
    %172 = arith.mulf %171, %165 : vector<8x16xf32>
    %173 = arith.addf %154, %172 : vector<8x16xf32>
    %c81 = arith.constant 81 : index
    %174 = memref.load %arg2[%c81] : memref<144xf32, #tpu.memory_space<smem>>
    %175 = vector.broadcast %174 : f32 to vector<8x16xf32>
    %176 = arith.mulf %175, %165 : vector<8x16xf32>
    %177 = arith.addf %158, %176 : vector<8x16xf32>
    %c117 = arith.constant 117 : index
    %178 = memref.load %arg2[%c117] : memref<144xf32, #tpu.memory_space<smem>>
    %179 = vector.broadcast %178 : f32 to vector<8x16xf32>
    %180 = arith.mulf %179, %165 : vector<8x16xf32>
    %181 = arith.addf %162, %180 : vector<8x16xf32>
    %182 = vector.extract_strided_slice %164 {offsets = [0, 1], sizes = [8, 16], strides = [1, 1]} : vector<8x18xf32> to vector<8x16xf32>
    %c10 = arith.constant 10 : index
    %183 = memref.load %arg2[%c10] : memref<144xf32, #tpu.memory_space<smem>>
    %184 = vector.broadcast %183 : f32 to vector<8x16xf32>
    %185 = arith.mulf %184, %182 : vector<8x16xf32>
    %186 = arith.addf %169, %185 : vector<8x16xf32>
    %c46 = arith.constant 46 : index
    %187 = memref.load %arg2[%c46] : memref<144xf32, #tpu.memory_space<smem>>
    %188 = vector.broadcast %187 : f32 to vector<8x16xf32>
    %189 = arith.mulf %188, %182 : vector<8x16xf32>
    %190 = arith.addf %173, %189 : vector<8x16xf32>
    %c82 = arith.constant 82 : index
    %191 = memref.load %arg2[%c82] : memref<144xf32, #tpu.memory_space<smem>>
    %192 = vector.broadcast %191 : f32 to vector<8x16xf32>
    %193 = arith.mulf %192, %182 : vector<8x16xf32>
    %194 = arith.addf %177, %193 : vector<8x16xf32>
    %c118 = arith.constant 118 : index
    %195 = memref.load %arg2[%c118] : memref<144xf32, #tpu.memory_space<smem>>
    %196 = vector.broadcast %195 : f32 to vector<8x16xf32>
    %197 = arith.mulf %196, %182 : vector<8x16xf32>
    %198 = arith.addf %181, %197 : vector<8x16xf32>
    %199 = vector.extract_strided_slice %164 {offsets = [0, 2], sizes = [8, 16], strides = [1, 1]} : vector<8x18xf32> to vector<8x16xf32>
    %c11 = arith.constant 11 : index
    %200 = memref.load %arg2[%c11] : memref<144xf32, #tpu.memory_space<smem>>
    %201 = vector.broadcast %200 : f32 to vector<8x16xf32>
    %202 = arith.mulf %201, %199 : vector<8x16xf32>
    %203 = arith.addf %186, %202 : vector<8x16xf32>
    %c47 = arith.constant 47 : index
    %204 = memref.load %arg2[%c47] : memref<144xf32, #tpu.memory_space<smem>>
    %205 = vector.broadcast %204 : f32 to vector<8x16xf32>
    %206 = arith.mulf %205, %199 : vector<8x16xf32>
    %207 = arith.addf %190, %206 : vector<8x16xf32>
    %c83 = arith.constant 83 : index
    %208 = memref.load %arg2[%c83] : memref<144xf32, #tpu.memory_space<smem>>
    %209 = vector.broadcast %208 : f32 to vector<8x16xf32>
    %210 = arith.mulf %209, %199 : vector<8x16xf32>
    %211 = arith.addf %194, %210 : vector<8x16xf32>
    %c119 = arith.constant 119 : index
    %212 = memref.load %arg2[%c119] : memref<144xf32, #tpu.memory_space<smem>>
    %213 = vector.broadcast %212 : f32 to vector<8x16xf32>
    %214 = arith.mulf %213, %199 : vector<8x16xf32>
    %215 = arith.addf %198, %214 : vector<8x16xf32>
    %c0_23 = arith.constant 0 : index
    %c1_24 = arith.constant 1 : index
    %c0_25 = arith.constant 0 : index
    %c1_26 = arith.constant 1 : index
    %c0_27 = arith.constant 0 : index
    %216 = vector.load %arg3[%c0_23, %c1_24, %c0_25, %c1_26, %c0_27] : memref<1x4x1x10x18xf32, #tpu.memory_space<vmem>>, vector<1x1x1x8x18xf32>
    %217 = vector.shape_cast %216 : vector<1x1x1x8x18xf32> to vector<8x18xf32>
    %218 = vector.extract_strided_slice %217 {offsets = [0, 0], sizes = [8, 16], strides = [1, 1]} : vector<8x18xf32> to vector<8x16xf32>
    %c12 = arith.constant 12 : index
    %219 = memref.load %arg2[%c12] : memref<144xf32, #tpu.memory_space<smem>>
    %220 = vector.broadcast %219 : f32 to vector<8x16xf32>
    %221 = arith.mulf %220, %218 : vector<8x16xf32>
    %222 = arith.addf %203, %221 : vector<8x16xf32>
    %c48 = arith.constant 48 : index
    %223 = memref.load %arg2[%c48] : memref<144xf32, #tpu.memory_space<smem>>
    %224 = vector.broadcast %223 : f32 to vector<8x16xf32>
    %225 = arith.mulf %224, %218 : vector<8x16xf32>
    %226 = arith.addf %207, %225 : vector<8x16xf32>
    %c84 = arith.constant 84 : index
    %227 = memref.load %arg2[%c84] : memref<144xf32, #tpu.memory_space<smem>>
    %228 = vector.broadcast %227 : f32 to vector<8x16xf32>
    %229 = arith.mulf %228, %218 : vector<8x16xf32>
    %230 = arith.addf %211, %229 : vector<8x16xf32>
    %c120 = arith.constant 120 : index
    %231 = memref.load %arg2[%c120] : memref<144xf32, #tpu.memory_space<smem>>
    %232 = vector.broadcast %231 : f32 to vector<8x16xf32>
    %233 = arith.mulf %232, %218 : vector<8x16xf32>
    %234 = arith.addf %215, %233 : vector<8x16xf32>
    %235 = vector.extract_strided_slice %217 {offsets = [0, 1], sizes = [8, 16], strides = [1, 1]} : vector<8x18xf32> to vector<8x16xf32>
    %c13 = arith.constant 13 : index
    %236 = memref.load %arg2[%c13] : memref<144xf32, #tpu.memory_space<smem>>
    %237 = vector.broadcast %236 : f32 to vector<8x16xf32>
    %238 = arith.mulf %237, %235 : vector<8x16xf32>
    %239 = arith.addf %222, %238 : vector<8x16xf32>
    %c49 = arith.constant 49 : index
    %240 = memref.load %arg2[%c49] : memref<144xf32, #tpu.memory_space<smem>>
    %241 = vector.broadcast %240 : f32 to vector<8x16xf32>
    %242 = arith.mulf %241, %235 : vector<8x16xf32>
    %243 = arith.addf %226, %242 : vector<8x16xf32>
    %c85 = arith.constant 85 : index
    %244 = memref.load %arg2[%c85] : memref<144xf32, #tpu.memory_space<smem>>
    %245 = vector.broadcast %244 : f32 to vector<8x16xf32>
    %246 = arith.mulf %245, %235 : vector<8x16xf32>
    %247 = arith.addf %230, %246 : vector<8x16xf32>
    %c121 = arith.constant 121 : index
    %248 = memref.load %arg2[%c121] : memref<144xf32, #tpu.memory_space<smem>>
    %249 = vector.broadcast %248 : f32 to vector<8x16xf32>
    %250 = arith.mulf %249, %235 : vector<8x16xf32>
    %251 = arith.addf %234, %250 : vector<8x16xf32>
    %252 = vector.extract_strided_slice %217 {offsets = [0, 2], sizes = [8, 16], strides = [1, 1]} : vector<8x18xf32> to vector<8x16xf32>
    %c14 = arith.constant 14 : index
    %253 = memref.load %arg2[%c14] : memref<144xf32, #tpu.memory_space<smem>>
    %254 = vector.broadcast %253 : f32 to vector<8x16xf32>
    %255 = arith.mulf %254, %252 : vector<8x16xf32>
    %256 = arith.addf %239, %255 : vector<8x16xf32>
    %c50 = arith.constant 50 : index
    %257 = memref.load %arg2[%c50] : memref<144xf32, #tpu.memory_space<smem>>
    %258 = vector.broadcast %257 : f32 to vector<8x16xf32>
    %259 = arith.mulf %258, %252 : vector<8x16xf32>
    %260 = arith.addf %243, %259 : vector<8x16xf32>
    %c86 = arith.constant 86 : index
    %261 = memref.load %arg2[%c86] : memref<144xf32, #tpu.memory_space<smem>>
    %262 = vector.broadcast %261 : f32 to vector<8x16xf32>
    %263 = arith.mulf %262, %252 : vector<8x16xf32>
    %264 = arith.addf %247, %263 : vector<8x16xf32>
    %c122 = arith.constant 122 : index
    %265 = memref.load %arg2[%c122] : memref<144xf32, #tpu.memory_space<smem>>
    %266 = vector.broadcast %265 : f32 to vector<8x16xf32>
    %267 = arith.mulf %266, %252 : vector<8x16xf32>
    %268 = arith.addf %251, %267 : vector<8x16xf32>
    %c0_28 = arith.constant 0 : index
    %c1_29 = arith.constant 1 : index
    %c0_30 = arith.constant 0 : index
    %c2_31 = arith.constant 2 : index
    %c0_32 = arith.constant 0 : index
    %269 = vector.load %arg3[%c0_28, %c1_29, %c0_30, %c2_31, %c0_32] : memref<1x4x1x10x18xf32, #tpu.memory_space<vmem>>, vector<1x1x1x8x18xf32>
    %270 = vector.shape_cast %269 : vector<1x1x1x8x18xf32> to vector<8x18xf32>
    %271 = vector.extract_strided_slice %270 {offsets = [0, 0], sizes = [8, 16], strides = [1, 1]} : vector<8x18xf32> to vector<8x16xf32>
    %c15 = arith.constant 15 : index
    %272 = memref.load %arg2[%c15] : memref<144xf32, #tpu.memory_space<smem>>
    %273 = vector.broadcast %272 : f32 to vector<8x16xf32>
    %274 = arith.mulf %273, %271 : vector<8x16xf32>
    %275 = arith.addf %256, %274 : vector<8x16xf32>
    %c51 = arith.constant 51 : index
    %276 = memref.load %arg2[%c51] : memref<144xf32, #tpu.memory_space<smem>>
    %277 = vector.broadcast %276 : f32 to vector<8x16xf32>
    %278 = arith.mulf %277, %271 : vector<8x16xf32>
    %279 = arith.addf %260, %278 : vector<8x16xf32>
    %c87 = arith.constant 87 : index
    %280 = memref.load %arg2[%c87] : memref<144xf32, #tpu.memory_space<smem>>
    %281 = vector.broadcast %280 : f32 to vector<8x16xf32>
    %282 = arith.mulf %281, %271 : vector<8x16xf32>
    %283 = arith.addf %264, %282 : vector<8x16xf32>
    %c123 = arith.constant 123 : index
    %284 = memref.load %arg2[%c123] : memref<144xf32, #tpu.memory_space<smem>>
    %285 = vector.broadcast %284 : f32 to vector<8x16xf32>
    %286 = arith.mulf %285, %271 : vector<8x16xf32>
    %287 = arith.addf %268, %286 : vector<8x16xf32>
    %288 = vector.extract_strided_slice %270 {offsets = [0, 1], sizes = [8, 16], strides = [1, 1]} : vector<8x18xf32> to vector<8x16xf32>
    %c16 = arith.constant 16 : index
    %289 = memref.load %arg2[%c16] : memref<144xf32, #tpu.memory_space<smem>>
    %290 = vector.broadcast %289 : f32 to vector<8x16xf32>
    %291 = arith.mulf %290, %288 : vector<8x16xf32>
    %292 = arith.addf %275, %291 : vector<8x16xf32>
    %c52 = arith.constant 52 : index
    %293 = memref.load %arg2[%c52] : memref<144xf32, #tpu.memory_space<smem>>
    %294 = vector.broadcast %293 : f32 to vector<8x16xf32>
    %295 = arith.mulf %294, %288 : vector<8x16xf32>
    %296 = arith.addf %279, %295 : vector<8x16xf32>
    %c88 = arith.constant 88 : index
    %297 = memref.load %arg2[%c88] : memref<144xf32, #tpu.memory_space<smem>>
    %298 = vector.broadcast %297 : f32 to vector<8x16xf32>
    %299 = arith.mulf %298, %288 : vector<8x16xf32>
    %300 = arith.addf %283, %299 : vector<8x16xf32>
    %c124 = arith.constant 124 : index
    %301 = memref.load %arg2[%c124] : memref<144xf32, #tpu.memory_space<smem>>
    %302 = vector.broadcast %301 : f32 to vector<8x16xf32>
    %303 = arith.mulf %302, %288 : vector<8x16xf32>
    %304 = arith.addf %287, %303 : vector<8x16xf32>
    %305 = vector.extract_strided_slice %270 {offsets = [0, 2], sizes = [8, 16], strides = [1, 1]} : vector<8x18xf32> to vector<8x16xf32>
    %c17 = arith.constant 17 : index
    %306 = memref.load %arg2[%c17] : memref<144xf32, #tpu.memory_space<smem>>
    %307 = vector.broadcast %306 : f32 to vector<8x16xf32>
    %308 = arith.mulf %307, %305 : vector<8x16xf32>
    %309 = arith.addf %292, %308 : vector<8x16xf32>
    %c53 = arith.constant 53 : index
    %310 = memref.load %arg2[%c53] : memref<144xf32, #tpu.memory_space<smem>>
    %311 = vector.broadcast %310 : f32 to vector<8x16xf32>
    %312 = arith.mulf %311, %305 : vector<8x16xf32>
    %313 = arith.addf %296, %312 : vector<8x16xf32>
    %c89 = arith.constant 89 : index
    %314 = memref.load %arg2[%c89] : memref<144xf32, #tpu.memory_space<smem>>
    %315 = vector.broadcast %314 : f32 to vector<8x16xf32>
    %316 = arith.mulf %315, %305 : vector<8x16xf32>
    %317 = arith.addf %300, %316 : vector<8x16xf32>
    %c125 = arith.constant 125 : index
    %318 = memref.load %arg2[%c125] : memref<144xf32, #tpu.memory_space<smem>>
    %319 = vector.broadcast %318 : f32 to vector<8x16xf32>
    %320 = arith.mulf %319, %305 : vector<8x16xf32>
    %321 = arith.addf %304, %320 : vector<8x16xf32>
    %c0_33 = arith.constant 0 : index
    %c2_34 = arith.constant 2 : index
    %c0_35 = arith.constant 0 : index
    %c0_36 = arith.constant 0 : index
    %c0_37 = arith.constant 0 : index
    %322 = vector.load %arg3[%c0_33, %c2_34, %c0_35, %c0_36, %c0_37] : memref<1x4x1x10x18xf32, #tpu.memory_space<vmem>>, vector<1x1x1x8x18xf32>
    %323 = vector.shape_cast %322 : vector<1x1x1x8x18xf32> to vector<8x18xf32>
    %324 = vector.extract_strided_slice %323 {offsets = [0, 0], sizes = [8, 16], strides = [1, 1]} : vector<8x18xf32> to vector<8x16xf32>
    %c18 = arith.constant 18 : index
    %325 = memref.load %arg2[%c18] : memref<144xf32, #tpu.memory_space<smem>>
    %326 = vector.broadcast %325 : f32 to vector<8x16xf32>
    %327 = arith.mulf %326, %324 : vector<8x16xf32>
    %328 = arith.addf %309, %327 : vector<8x16xf32>
    %c54 = arith.constant 54 : index
    %329 = memref.load %arg2[%c54] : memref<144xf32, #tpu.memory_space<smem>>
    %330 = vector.broadcast %329 : f32 to vector<8x16xf32>
    %331 = arith.mulf %330, %324 : vector<8x16xf32>
    %332 = arith.addf %313, %331 : vector<8x16xf32>
    %c90 = arith.constant 90 : index
    %333 = memref.load %arg2[%c90] : memref<144xf32, #tpu.memory_space<smem>>
    %334 = vector.broadcast %333 : f32 to vector<8x16xf32>
    %335 = arith.mulf %334, %324 : vector<8x16xf32>
    %336 = arith.addf %317, %335 : vector<8x16xf32>
    %c126 = arith.constant 126 : index
    %337 = memref.load %arg2[%c126] : memref<144xf32, #tpu.memory_space<smem>>
    %338 = vector.broadcast %337 : f32 to vector<8x16xf32>
    %339 = arith.mulf %338, %324 : vector<8x16xf32>
    %340 = arith.addf %321, %339 : vector<8x16xf32>
    %341 = vector.extract_strided_slice %323 {offsets = [0, 1], sizes = [8, 16], strides = [1, 1]} : vector<8x18xf32> to vector<8x16xf32>
    %c19 = arith.constant 19 : index
    %342 = memref.load %arg2[%c19] : memref<144xf32, #tpu.memory_space<smem>>
    %343 = vector.broadcast %342 : f32 to vector<8x16xf32>
    %344 = arith.mulf %343, %341 : vector<8x16xf32>
    %345 = arith.addf %328, %344 : vector<8x16xf32>
    %c55 = arith.constant 55 : index
    %346 = memref.load %arg2[%c55] : memref<144xf32, #tpu.memory_space<smem>>
    %347 = vector.broadcast %346 : f32 to vector<8x16xf32>
    %348 = arith.mulf %347, %341 : vector<8x16xf32>
    %349 = arith.addf %332, %348 : vector<8x16xf32>
    %c91 = arith.constant 91 : index
    %350 = memref.load %arg2[%c91] : memref<144xf32, #tpu.memory_space<smem>>
    %351 = vector.broadcast %350 : f32 to vector<8x16xf32>
    %352 = arith.mulf %351, %341 : vector<8x16xf32>
    %353 = arith.addf %336, %352 : vector<8x16xf32>
    %c127 = arith.constant 127 : index
    %354 = memref.load %arg2[%c127] : memref<144xf32, #tpu.memory_space<smem>>
    %355 = vector.broadcast %354 : f32 to vector<8x16xf32>
    %356 = arith.mulf %355, %341 : vector<8x16xf32>
    %357 = arith.addf %340, %356 : vector<8x16xf32>
    %358 = vector.extract_strided_slice %323 {offsets = [0, 2], sizes = [8, 16], strides = [1, 1]} : vector<8x18xf32> to vector<8x16xf32>
    %c20 = arith.constant 20 : index
    %359 = memref.load %arg2[%c20] : memref<144xf32, #tpu.memory_space<smem>>
    %360 = vector.broadcast %359 : f32 to vector<8x16xf32>
    %361 = arith.mulf %360, %358 : vector<8x16xf32>
    %362 = arith.addf %345, %361 : vector<8x16xf32>
    %c56 = arith.constant 56 : index
    %363 = memref.load %arg2[%c56] : memref<144xf32, #tpu.memory_space<smem>>
    %364 = vector.broadcast %363 : f32 to vector<8x16xf32>
    %365 = arith.mulf %364, %358 : vector<8x16xf32>
    %366 = arith.addf %349, %365 : vector<8x16xf32>
    %c92 = arith.constant 92 : index
    %367 = memref.load %arg2[%c92] : memref<144xf32, #tpu.memory_space<smem>>
    %368 = vector.broadcast %367 : f32 to vector<8x16xf32>
    %369 = arith.mulf %368, %358 : vector<8x16xf32>
    %370 = arith.addf %353, %369 : vector<8x16xf32>
    %c128 = arith.constant 128 : index
    %371 = memref.load %arg2[%c128] : memref<144xf32, #tpu.memory_space<smem>>
    %372 = vector.broadcast %371 : f32 to vector<8x16xf32>
    %373 = arith.mulf %372, %358 : vector<8x16xf32>
    %374 = arith.addf %357, %373 : vector<8x16xf32>
    %c0_38 = arith.constant 0 : index
    %c2_39 = arith.constant 2 : index
    %c0_40 = arith.constant 0 : index
    %c1_41 = arith.constant 1 : index
    %c0_42 = arith.constant 0 : index
    %375 = vector.load %arg3[%c0_38, %c2_39, %c0_40, %c1_41, %c0_42] : memref<1x4x1x10x18xf32, #tpu.memory_space<vmem>>, vector<1x1x1x8x18xf32>
    %376 = vector.shape_cast %375 : vector<1x1x1x8x18xf32> to vector<8x18xf32>
    %377 = vector.extract_strided_slice %376 {offsets = [0, 0], sizes = [8, 16], strides = [1, 1]} : vector<8x18xf32> to vector<8x16xf32>
    %c21 = arith.constant 21 : index
    %378 = memref.load %arg2[%c21] : memref<144xf32, #tpu.memory_space<smem>>
    %379 = vector.broadcast %378 : f32 to vector<8x16xf32>
    %380 = arith.mulf %379, %377 : vector<8x16xf32>
    %381 = arith.addf %362, %380 : vector<8x16xf32>
    %c57 = arith.constant 57 : index
    %382 = memref.load %arg2[%c57] : memref<144xf32, #tpu.memory_space<smem>>
    %383 = vector.broadcast %382 : f32 to vector<8x16xf32>
    %384 = arith.mulf %383, %377 : vector<8x16xf32>
    %385 = arith.addf %366, %384 : vector<8x16xf32>
    %c93 = arith.constant 93 : index
    %386 = memref.load %arg2[%c93] : memref<144xf32, #tpu.memory_space<smem>>
    %387 = vector.broadcast %386 : f32 to vector<8x16xf32>
    %388 = arith.mulf %387, %377 : vector<8x16xf32>
    %389 = arith.addf %370, %388 : vector<8x16xf32>
    %c129 = arith.constant 129 : index
    %390 = memref.load %arg2[%c129] : memref<144xf32, #tpu.memory_space<smem>>
    %391 = vector.broadcast %390 : f32 to vector<8x16xf32>
    %392 = arith.mulf %391, %377 : vector<8x16xf32>
    %393 = arith.addf %374, %392 : vector<8x16xf32>
    %394 = vector.extract_strided_slice %376 {offsets = [0, 1], sizes = [8, 16], strides = [1, 1]} : vector<8x18xf32> to vector<8x16xf32>
    %c22 = arith.constant 22 : index
    %395 = memref.load %arg2[%c22] : memref<144xf32, #tpu.memory_space<smem>>
    %396 = vector.broadcast %395 : f32 to vector<8x16xf32>
    %397 = arith.mulf %396, %394 : vector<8x16xf32>
    %398 = arith.addf %381, %397 : vector<8x16xf32>
    %c58 = arith.constant 58 : index
    %399 = memref.load %arg2[%c58] : memref<144xf32, #tpu.memory_space<smem>>
    %400 = vector.broadcast %399 : f32 to vector<8x16xf32>
    %401 = arith.mulf %400, %394 : vector<8x16xf32>
    %402 = arith.addf %385, %401 : vector<8x16xf32>
    %c94 = arith.constant 94 : index
    %403 = memref.load %arg2[%c94] : memref<144xf32, #tpu.memory_space<smem>>
    %404 = vector.broadcast %403 : f32 to vector<8x16xf32>
    %405 = arith.mulf %404, %394 : vector<8x16xf32>
    %406 = arith.addf %389, %405 : vector<8x16xf32>
    %c130 = arith.constant 130 : index
    %407 = memref.load %arg2[%c130] : memref<144xf32, #tpu.memory_space<smem>>
    %408 = vector.broadcast %407 : f32 to vector<8x16xf32>
    %409 = arith.mulf %408, %394 : vector<8x16xf32>
    %410 = arith.addf %393, %409 : vector<8x16xf32>
    %411 = vector.extract_strided_slice %376 {offsets = [0, 2], sizes = [8, 16], strides = [1, 1]} : vector<8x18xf32> to vector<8x16xf32>
    %c23 = arith.constant 23 : index
    %412 = memref.load %arg2[%c23] : memref<144xf32, #tpu.memory_space<smem>>
    %413 = vector.broadcast %412 : f32 to vector<8x16xf32>
    %414 = arith.mulf %413, %411 : vector<8x16xf32>
    %415 = arith.addf %398, %414 : vector<8x16xf32>
    %c59 = arith.constant 59 : index
    %416 = memref.load %arg2[%c59] : memref<144xf32, #tpu.memory_space<smem>>
    %417 = vector.broadcast %416 : f32 to vector<8x16xf32>
    %418 = arith.mulf %417, %411 : vector<8x16xf32>
    %419 = arith.addf %402, %418 : vector<8x16xf32>
    %c95 = arith.constant 95 : index
    %420 = memref.load %arg2[%c95] : memref<144xf32, #tpu.memory_space<smem>>
    %421 = vector.broadcast %420 : f32 to vector<8x16xf32>
    %422 = arith.mulf %421, %411 : vector<8x16xf32>
    %423 = arith.addf %406, %422 : vector<8x16xf32>
    %c131 = arith.constant 131 : index
    %424 = memref.load %arg2[%c131] : memref<144xf32, #tpu.memory_space<smem>>
    %425 = vector.broadcast %424 : f32 to vector<8x16xf32>
    %426 = arith.mulf %425, %411 : vector<8x16xf32>
    %427 = arith.addf %410, %426 : vector<8x16xf32>
    %c0_43 = arith.constant 0 : index
    %c2_44 = arith.constant 2 : index
    %c0_45 = arith.constant 0 : index
    %c2_46 = arith.constant 2 : index
    %c0_47 = arith.constant 0 : index
    %428 = vector.load %arg3[%c0_43, %c2_44, %c0_45, %c2_46, %c0_47] : memref<1x4x1x10x18xf32, #tpu.memory_space<vmem>>, vector<1x1x1x8x18xf32>
    %429 = vector.shape_cast %428 : vector<1x1x1x8x18xf32> to vector<8x18xf32>
    %430 = vector.extract_strided_slice %429 {offsets = [0, 0], sizes = [8, 16], strides = [1, 1]} : vector<8x18xf32> to vector<8x16xf32>
    %c24 = arith.constant 24 : index
    %431 = memref.load %arg2[%c24] : memref<144xf32, #tpu.memory_space<smem>>
    %432 = vector.broadcast %431 : f32 to vector<8x16xf32>
    %433 = arith.mulf %432, %430 : vector<8x16xf32>
    %434 = arith.addf %415, %433 : vector<8x16xf32>
    %c60 = arith.constant 60 : index
    %435 = memref.load %arg2[%c60] : memref<144xf32, #tpu.memory_space<smem>>
    %436 = vector.broadcast %435 : f32 to vector<8x16xf32>
    %437 = arith.mulf %436, %430 : vector<8x16xf32>
    %438 = arith.addf %419, %437 : vector<8x16xf32>
    %c96 = arith.constant 96 : index
    %439 = memref.load %arg2[%c96] : memref<144xf32, #tpu.memory_space<smem>>
    %440 = vector.broadcast %439 : f32 to vector<8x16xf32>
    %441 = arith.mulf %440, %430 : vector<8x16xf32>
    %442 = arith.addf %423, %441 : vector<8x16xf32>
    %c132 = arith.constant 132 : index
    %443 = memref.load %arg2[%c132] : memref<144xf32, #tpu.memory_space<smem>>
    %444 = vector.broadcast %443 : f32 to vector<8x16xf32>
    %445 = arith.mulf %444, %430 : vector<8x16xf32>
    %446 = arith.addf %427, %445 : vector<8x16xf32>
    %447 = vector.extract_strided_slice %429 {offsets = [0, 1], sizes = [8, 16], strides = [1, 1]} : vector<8x18xf32> to vector<8x16xf32>
    %c25 = arith.constant 25 : index
    %448 = memref.load %arg2[%c25] : memref<144xf32, #tpu.memory_space<smem>>
    %449 = vector.broadcast %448 : f32 to vector<8x16xf32>
    %450 = arith.mulf %449, %447 : vector<8x16xf32>
    %451 = arith.addf %434, %450 : vector<8x16xf32>
    %c61 = arith.constant 61 : index
    %452 = memref.load %arg2[%c61] : memref<144xf32, #tpu.memory_space<smem>>
    %453 = vector.broadcast %452 : f32 to vector<8x16xf32>
    %454 = arith.mulf %453, %447 : vector<8x16xf32>
    %455 = arith.addf %438, %454 : vector<8x16xf32>
    %c97 = arith.constant 97 : index
    %456 = memref.load %arg2[%c97] : memref<144xf32, #tpu.memory_space<smem>>
    %457 = vector.broadcast %456 : f32 to vector<8x16xf32>
    %458 = arith.mulf %457, %447 : vector<8x16xf32>
    %459 = arith.addf %442, %458 : vector<8x16xf32>
    %c133 = arith.constant 133 : index
    %460 = memref.load %arg2[%c133] : memref<144xf32, #tpu.memory_space<smem>>
    %461 = vector.broadcast %460 : f32 to vector<8x16xf32>
    %462 = arith.mulf %461, %447 : vector<8x16xf32>
    %463 = arith.addf %446, %462 : vector<8x16xf32>
    %464 = vector.extract_strided_slice %429 {offsets = [0, 2], sizes = [8, 16], strides = [1, 1]} : vector<8x18xf32> to vector<8x16xf32>
    %c26 = arith.constant 26 : index
    %465 = memref.load %arg2[%c26] : memref<144xf32, #tpu.memory_space<smem>>
    %466 = vector.broadcast %465 : f32 to vector<8x16xf32>
    %467 = arith.mulf %466, %464 : vector<8x16xf32>
    %468 = arith.addf %451, %467 : vector<8x16xf32>
    %c62 = arith.constant 62 : index
    %469 = memref.load %arg2[%c62] : memref<144xf32, #tpu.memory_space<smem>>
    %470 = vector.broadcast %469 : f32 to vector<8x16xf32>
    %471 = arith.mulf %470, %464 : vector<8x16xf32>
    %472 = arith.addf %455, %471 : vector<8x16xf32>
    %c98 = arith.constant 98 : index
    %473 = memref.load %arg2[%c98] : memref<144xf32, #tpu.memory_space<smem>>
    %474 = vector.broadcast %473 : f32 to vector<8x16xf32>
    %475 = arith.mulf %474, %464 : vector<8x16xf32>
    %476 = arith.addf %459, %475 : vector<8x16xf32>
    %c134 = arith.constant 134 : index
    %477 = memref.load %arg2[%c134] : memref<144xf32, #tpu.memory_space<smem>>
    %478 = vector.broadcast %477 : f32 to vector<8x16xf32>
    %479 = arith.mulf %478, %464 : vector<8x16xf32>
    %480 = arith.addf %463, %479 : vector<8x16xf32>
    %c0_48 = arith.constant 0 : index
    %c3_49 = arith.constant 3 : index
    %c0_50 = arith.constant 0 : index
    %c0_51 = arith.constant 0 : index
    %c0_52 = arith.constant 0 : index
    %481 = vector.load %arg3[%c0_48, %c3_49, %c0_50, %c0_51, %c0_52] : memref<1x4x1x10x18xf32, #tpu.memory_space<vmem>>, vector<1x1x1x8x18xf32>
    %482 = vector.shape_cast %481 : vector<1x1x1x8x18xf32> to vector<8x18xf32>
    %483 = vector.extract_strided_slice %482 {offsets = [0, 0], sizes = [8, 16], strides = [1, 1]} : vector<8x18xf32> to vector<8x16xf32>
    %c27 = arith.constant 27 : index
    %484 = memref.load %arg2[%c27] : memref<144xf32, #tpu.memory_space<smem>>
    %485 = vector.broadcast %484 : f32 to vector<8x16xf32>
    %486 = arith.mulf %485, %483 : vector<8x16xf32>
    %487 = arith.addf %468, %486 : vector<8x16xf32>
    %c63 = arith.constant 63 : index
    %488 = memref.load %arg2[%c63] : memref<144xf32, #tpu.memory_space<smem>>
    %489 = vector.broadcast %488 : f32 to vector<8x16xf32>
    %490 = arith.mulf %489, %483 : vector<8x16xf32>
    %491 = arith.addf %472, %490 : vector<8x16xf32>
    %c99 = arith.constant 99 : index
    %492 = memref.load %arg2[%c99] : memref<144xf32, #tpu.memory_space<smem>>
    %493 = vector.broadcast %492 : f32 to vector<8x16xf32>
    %494 = arith.mulf %493, %483 : vector<8x16xf32>
    %495 = arith.addf %476, %494 : vector<8x16xf32>
    %c135 = arith.constant 135 : index
    %496 = memref.load %arg2[%c135] : memref<144xf32, #tpu.memory_space<smem>>
    %497 = vector.broadcast %496 : f32 to vector<8x16xf32>
    %498 = arith.mulf %497, %483 : vector<8x16xf32>
    %499 = arith.addf %480, %498 : vector<8x16xf32>
    %500 = vector.extract_strided_slice %482 {offsets = [0, 1], sizes = [8, 16], strides = [1, 1]} : vector<8x18xf32> to vector<8x16xf32>
    %c28 = arith.constant 28 : index
    %501 = memref.load %arg2[%c28] : memref<144xf32, #tpu.memory_space<smem>>
    %502 = vector.broadcast %501 : f32 to vector<8x16xf32>
    %503 = arith.mulf %502, %500 : vector<8x16xf32>
    %504 = arith.addf %487, %503 : vector<8x16xf32>
    %c64 = arith.constant 64 : index
    %505 = memref.load %arg2[%c64] : memref<144xf32, #tpu.memory_space<smem>>
    %506 = vector.broadcast %505 : f32 to vector<8x16xf32>
    %507 = arith.mulf %506, %500 : vector<8x16xf32>
    %508 = arith.addf %491, %507 : vector<8x16xf32>
    %c100 = arith.constant 100 : index
    %509 = memref.load %arg2[%c100] : memref<144xf32, #tpu.memory_space<smem>>
    %510 = vector.broadcast %509 : f32 to vector<8x16xf32>
    %511 = arith.mulf %510, %500 : vector<8x16xf32>
    %512 = arith.addf %495, %511 : vector<8x16xf32>
    %c136 = arith.constant 136 : index
    %513 = memref.load %arg2[%c136] : memref<144xf32, #tpu.memory_space<smem>>
    %514 = vector.broadcast %513 : f32 to vector<8x16xf32>
    %515 = arith.mulf %514, %500 : vector<8x16xf32>
    %516 = arith.addf %499, %515 : vector<8x16xf32>
    %517 = vector.extract_strided_slice %482 {offsets = [0, 2], sizes = [8, 16], strides = [1, 1]} : vector<8x18xf32> to vector<8x16xf32>
    %c29 = arith.constant 29 : index
    %518 = memref.load %arg2[%c29] : memref<144xf32, #tpu.memory_space<smem>>
    %519 = vector.broadcast %518 : f32 to vector<8x16xf32>
    %520 = arith.mulf %519, %517 : vector<8x16xf32>
    %521 = arith.addf %504, %520 : vector<8x16xf32>
    %c65 = arith.constant 65 : index
    %522 = memref.load %arg2[%c65] : memref<144xf32, #tpu.memory_space<smem>>
    %523 = vector.broadcast %522 : f32 to vector<8x16xf32>
    %524 = arith.mulf %523, %517 : vector<8x16xf32>
    %525 = arith.addf %508, %524 : vector<8x16xf32>
    %c101 = arith.constant 101 : index
    %526 = memref.load %arg2[%c101] : memref<144xf32, #tpu.memory_space<smem>>
    %527 = vector.broadcast %526 : f32 to vector<8x16xf32>
    %528 = arith.mulf %527, %517 : vector<8x16xf32>
    %529 = arith.addf %512, %528 : vector<8x16xf32>
    %c137 = arith.constant 137 : index
    %530 = memref.load %arg2[%c137] : memref<144xf32, #tpu.memory_space<smem>>
    %531 = vector.broadcast %530 : f32 to vector<8x16xf32>
    %532 = arith.mulf %531, %517 : vector<8x16xf32>
    %533 = arith.addf %516, %532 : vector<8x16xf32>
    %c0_53 = arith.constant 0 : index
    %c3_54 = arith.constant 3 : index
    %c0_55 = arith.constant 0 : index
    %c1_56 = arith.constant 1 : index
    %c0_57 = arith.constant 0 : index
    %534 = vector.load %arg3[%c0_53, %c3_54, %c0_55, %c1_56, %c0_57] : memref<1x4x1x10x18xf32, #tpu.memory_space<vmem>>, vector<1x1x1x8x18xf32>
    %535 = vector.shape_cast %534 : vector<1x1x1x8x18xf32> to vector<8x18xf32>
    %536 = vector.extract_strided_slice %535 {offsets = [0, 0], sizes = [8, 16], strides = [1, 1]} : vector<8x18xf32> to vector<8x16xf32>
    %c30 = arith.constant 30 : index
    %537 = memref.load %arg2[%c30] : memref<144xf32, #tpu.memory_space<smem>>
    %538 = vector.broadcast %537 : f32 to vector<8x16xf32>
    %539 = arith.mulf %538, %536 : vector<8x16xf32>
    %540 = arith.addf %521, %539 : vector<8x16xf32>
    %c66 = arith.constant 66 : index
    %541 = memref.load %arg2[%c66] : memref<144xf32, #tpu.memory_space<smem>>
    %542 = vector.broadcast %541 : f32 to vector<8x16xf32>
    %543 = arith.mulf %542, %536 : vector<8x16xf32>
    %544 = arith.addf %525, %543 : vector<8x16xf32>
    %c102 = arith.constant 102 : index
    %545 = memref.load %arg2[%c102] : memref<144xf32, #tpu.memory_space<smem>>
    %546 = vector.broadcast %545 : f32 to vector<8x16xf32>
    %547 = arith.mulf %546, %536 : vector<8x16xf32>
    %548 = arith.addf %529, %547 : vector<8x16xf32>
    %c138 = arith.constant 138 : index
    %549 = memref.load %arg2[%c138] : memref<144xf32, #tpu.memory_space<smem>>
    %550 = vector.broadcast %549 : f32 to vector<8x16xf32>
    %551 = arith.mulf %550, %536 : vector<8x16xf32>
    %552 = arith.addf %533, %551 : vector<8x16xf32>
    %553 = vector.extract_strided_slice %535 {offsets = [0, 1], sizes = [8, 16], strides = [1, 1]} : vector<8x18xf32> to vector<8x16xf32>
    %c31 = arith.constant 31 : index
    %554 = memref.load %arg2[%c31] : memref<144xf32, #tpu.memory_space<smem>>
    %555 = vector.broadcast %554 : f32 to vector<8x16xf32>
    %556 = arith.mulf %555, %553 : vector<8x16xf32>
    %557 = arith.addf %540, %556 : vector<8x16xf32>
    %c67 = arith.constant 67 : index
    %558 = memref.load %arg2[%c67] : memref<144xf32, #tpu.memory_space<smem>>
    %559 = vector.broadcast %558 : f32 to vector<8x16xf32>
    %560 = arith.mulf %559, %553 : vector<8x16xf32>
    %561 = arith.addf %544, %560 : vector<8x16xf32>
    %c103 = arith.constant 103 : index
    %562 = memref.load %arg2[%c103] : memref<144xf32, #tpu.memory_space<smem>>
    %563 = vector.broadcast %562 : f32 to vector<8x16xf32>
    %564 = arith.mulf %563, %553 : vector<8x16xf32>
    %565 = arith.addf %548, %564 : vector<8x16xf32>
    %c139 = arith.constant 139 : index
    %566 = memref.load %arg2[%c139] : memref<144xf32, #tpu.memory_space<smem>>
    %567 = vector.broadcast %566 : f32 to vector<8x16xf32>
    %568 = arith.mulf %567, %553 : vector<8x16xf32>
    %569 = arith.addf %552, %568 : vector<8x16xf32>
    %570 = vector.extract_strided_slice %535 {offsets = [0, 2], sizes = [8, 16], strides = [1, 1]} : vector<8x18xf32> to vector<8x16xf32>
    %c32 = arith.constant 32 : index
    %571 = memref.load %arg2[%c32] : memref<144xf32, #tpu.memory_space<smem>>
    %572 = vector.broadcast %571 : f32 to vector<8x16xf32>
    %573 = arith.mulf %572, %570 : vector<8x16xf32>
    %574 = arith.addf %557, %573 : vector<8x16xf32>
    %c68 = arith.constant 68 : index
    %575 = memref.load %arg2[%c68] : memref<144xf32, #tpu.memory_space<smem>>
    %576 = vector.broadcast %575 : f32 to vector<8x16xf32>
    %577 = arith.mulf %576, %570 : vector<8x16xf32>
    %578 = arith.addf %561, %577 : vector<8x16xf32>
    %c104 = arith.constant 104 : index
    %579 = memref.load %arg2[%c104] : memref<144xf32, #tpu.memory_space<smem>>
    %580 = vector.broadcast %579 : f32 to vector<8x16xf32>
    %581 = arith.mulf %580, %570 : vector<8x16xf32>
    %582 = arith.addf %565, %581 : vector<8x16xf32>
    %c140 = arith.constant 140 : index
    %583 = memref.load %arg2[%c140] : memref<144xf32, #tpu.memory_space<smem>>
    %584 = vector.broadcast %583 : f32 to vector<8x16xf32>
    %585 = arith.mulf %584, %570 : vector<8x16xf32>
    %586 = arith.addf %569, %585 : vector<8x16xf32>
    %c0_58 = arith.constant 0 : index
    %c3_59 = arith.constant 3 : index
    %c0_60 = arith.constant 0 : index
    %c2_61 = arith.constant 2 : index
    %c0_62 = arith.constant 0 : index
    %587 = vector.load %arg3[%c0_58, %c3_59, %c0_60, %c2_61, %c0_62] : memref<1x4x1x10x18xf32, #tpu.memory_space<vmem>>, vector<1x1x1x8x18xf32>
    %588 = vector.shape_cast %587 : vector<1x1x1x8x18xf32> to vector<8x18xf32>
    %589 = vector.extract_strided_slice %588 {offsets = [0, 0], sizes = [8, 16], strides = [1, 1]} : vector<8x18xf32> to vector<8x16xf32>
    %c33 = arith.constant 33 : index
    %590 = memref.load %arg2[%c33] : memref<144xf32, #tpu.memory_space<smem>>
    %591 = vector.broadcast %590 : f32 to vector<8x16xf32>
    %592 = arith.mulf %591, %589 : vector<8x16xf32>
    %593 = arith.addf %574, %592 : vector<8x16xf32>
    %c69 = arith.constant 69 : index
    %594 = memref.load %arg2[%c69] : memref<144xf32, #tpu.memory_space<smem>>
    %595 = vector.broadcast %594 : f32 to vector<8x16xf32>
    %596 = arith.mulf %595, %589 : vector<8x16xf32>
    %597 = arith.addf %578, %596 : vector<8x16xf32>
    %c105 = arith.constant 105 : index
    %598 = memref.load %arg2[%c105] : memref<144xf32, #tpu.memory_space<smem>>
    %599 = vector.broadcast %598 : f32 to vector<8x16xf32>
    %600 = arith.mulf %599, %589 : vector<8x16xf32>
    %601 = arith.addf %582, %600 : vector<8x16xf32>
    %c141 = arith.constant 141 : index
    %602 = memref.load %arg2[%c141] : memref<144xf32, #tpu.memory_space<smem>>
    %603 = vector.broadcast %602 : f32 to vector<8x16xf32>
    %604 = arith.mulf %603, %589 : vector<8x16xf32>
    %605 = arith.addf %586, %604 : vector<8x16xf32>
    %606 = vector.extract_strided_slice %588 {offsets = [0, 1], sizes = [8, 16], strides = [1, 1]} : vector<8x18xf32> to vector<8x16xf32>
    %c34 = arith.constant 34 : index
    %607 = memref.load %arg2[%c34] : memref<144xf32, #tpu.memory_space<smem>>
    %608 = vector.broadcast %607 : f32 to vector<8x16xf32>
    %609 = arith.mulf %608, %606 : vector<8x16xf32>
    %610 = arith.addf %593, %609 : vector<8x16xf32>
    %c70 = arith.constant 70 : index
    %611 = memref.load %arg2[%c70] : memref<144xf32, #tpu.memory_space<smem>>
    %612 = vector.broadcast %611 : f32 to vector<8x16xf32>
    %613 = arith.mulf %612, %606 : vector<8x16xf32>
    %614 = arith.addf %597, %613 : vector<8x16xf32>
    %c106 = arith.constant 106 : index
    %615 = memref.load %arg2[%c106] : memref<144xf32, #tpu.memory_space<smem>>
    %616 = vector.broadcast %615 : f32 to vector<8x16xf32>
    %617 = arith.mulf %616, %606 : vector<8x16xf32>
    %618 = arith.addf %601, %617 : vector<8x16xf32>
    %c142 = arith.constant 142 : index
    %619 = memref.load %arg2[%c142] : memref<144xf32, #tpu.memory_space<smem>>
    %620 = vector.broadcast %619 : f32 to vector<8x16xf32>
    %621 = arith.mulf %620, %606 : vector<8x16xf32>
    %622 = arith.addf %605, %621 : vector<8x16xf32>
    %623 = vector.extract_strided_slice %588 {offsets = [0, 2], sizes = [8, 16], strides = [1, 1]} : vector<8x18xf32> to vector<8x16xf32>
    %c35 = arith.constant 35 : index
    %624 = memref.load %arg2[%c35] : memref<144xf32, #tpu.memory_space<smem>>
    %625 = vector.broadcast %624 : f32 to vector<8x16xf32>
    %626 = arith.mulf %625, %623 : vector<8x16xf32>
    %627 = arith.addf %610, %626 : vector<8x16xf32>
    %c71 = arith.constant 71 : index
    %628 = memref.load %arg2[%c71] : memref<144xf32, #tpu.memory_space<smem>>
    %629 = vector.broadcast %628 : f32 to vector<8x16xf32>
    %630 = arith.mulf %629, %623 : vector<8x16xf32>
    %631 = arith.addf %614, %630 : vector<8x16xf32>
    %c107 = arith.constant 107 : index
    %632 = memref.load %arg2[%c107] : memref<144xf32, #tpu.memory_space<smem>>
    %633 = vector.broadcast %632 : f32 to vector<8x16xf32>
    %634 = arith.mulf %633, %623 : vector<8x16xf32>
    %635 = arith.addf %618, %634 : vector<8x16xf32>
    %c143 = arith.constant 143 : index
    %636 = memref.load %arg2[%c143] : memref<144xf32, #tpu.memory_space<smem>>
    %637 = vector.broadcast %636 : f32 to vector<8x16xf32>
    %638 = arith.mulf %637, %623 : vector<8x16xf32>
    %639 = arith.addf %622, %638 : vector<8x16xf32>
    %c0_63 = arith.constant 0 : index
    %c0_64 = arith.constant 0 : index
    %c0_65 = arith.constant 0 : index
    %c0_66 = arith.constant 0 : index
    %640 = vector.load %arg4[%c0_63, %c0_64, %c0_65, %c0_66] : memref<1x4x8x16xf32, #tpu.memory_space<vmem>>, vector<1x1x8x16xf32>
    %641 = vector.shape_cast %640 : vector<1x1x8x16xf32> to vector<8x16xf32>
    %642 = vector.shape_cast %627 : vector<8x16xf32> to vector<1x1x8x16xf32>
    tpu.vector_store %arg4[%c0_63, %c0_64, %c0_65, %c0_66], %642 {strides = array<i32>} : memref<1x4x8x16xf32, #tpu.memory_space<vmem>>, vector<1x1x8x16xf32>,
    %c0_67 = arith.constant 0 : index
    %c1_68 = arith.constant 1 : index
    %c0_69 = arith.constant 0 : index
    %c0_70 = arith.constant 0 : index
    %643 = vector.load %arg4[%c0_67, %c1_68, %c0_69, %c0_70] : memref<1x4x8x16xf32, #tpu.memory_space<vmem>>, vector<1x1x8x16xf32>
    %644 = vector.shape_cast %643 : vector<1x1x8x16xf32> to vector<8x16xf32>
    %645 = vector.shape_cast %631 : vector<8x16xf32> to vector<1x1x8x16xf32>
    tpu.vector_store %arg4[%c0_67, %c1_68, %c0_69, %c0_70], %645 {strides = array<i32>} : memref<1x4x8x16xf32, #tpu.memory_space<vmem>>, vector<1x1x8x16xf32>,
    %c0_71 = arith.constant 0 : index
    %c2_72 = arith.constant 2 : index
    %c0_73 = arith.constant 0 : index
    %c0_74 = arith.constant 0 : index
    %646 = vector.load %arg4[%c0_71, %c2_72, %c0_73, %c0_74] : memref<1x4x8x16xf32, #tpu.memory_space<vmem>>, vector<1x1x8x16xf32>
    %647 = vector.shape_cast %646 : vector<1x1x8x16xf32> to vector<8x16xf32>
    %648 = vector.shape_cast %635 : vector<8x16xf32> to vector<1x1x8x16xf32>
    tpu.vector_store %arg4[%c0_71, %c2_72, %c0_73, %c0_74], %648 {strides = array<i32>} : memref<1x4x8x16xf32, #tpu.memory_space<vmem>>, vector<1x1x8x16xf32>,
    %c0_75 = arith.constant 0 : index
    %c3_76 = arith.constant 3 : index
    %c0_77 = arith.constant 0 : index
    %c0_78 = arith.constant 0 : index
    %649 = vector.load %arg4[%c0_75, %c3_76, %c0_77, %c0_78] : memref<1x4x8x16xf32, #tpu.memory_space<vmem>>, vector<1x1x8x16xf32>
    %650 = vector.shape_cast %649 : vector<1x1x8x16xf32> to vector<8x16xf32>
    %651 = vector.shape_cast %639 : vector<8x16xf32> to vector<1x1x8x16xf32>
    tpu.vector_store %arg4[%c0_75, %c3_76, %c0_77, %c0_78], %651 {strides = array<i32>} : memref<1x4x8x16xf32, #tpu.memory_space<vmem>>, vector<1x1x8x16xf32>,
    return
  }
  func.func @transform_0(%arg0: i32, %arg1: i32) -> i32 {
    %c0_i32 = arith.constant 0 : i32
    %c0_i32_0 = arith.constant 0 : i32
    return %c0_i32 : i32
  }
  func.func @transform_1(%arg0: i32, %arg1: i32) -> (i32, i32, i32, i32, i32) {
    %c0_i32 = arith.constant 0 : i32
    %c0_i32_0 = arith.constant 0 : i32
    %c0_i32_1 = arith.constant 0 : i32
    %c0_i32_2 = arith.constant 0 : i32
    return %arg0, %c0_i32, %arg1, %c0_i32_0, %c0_i32_1 : i32, i32, i32, i32, i32
  }
  func.func @transform_2(%arg0: i32, %arg1: i32) -> (i32, i32, i32, i32) {
    %c0_i32 = arith.constant 0 : i32
    %c0_i32_0 = arith.constant 0 : i32
    %c0_i32_1 = arith.constant 0 : i32
    return %arg0, %c0_i32, %arg1, %c0_i32_0 : i32, i32, i32, i32
  }
}

</mosaic_0001>

<llo_original>
// kernel: tpu_custom_call.1
$region0: #{tpu_custom_call.1}
  #allocation0 [shape = 'u32[]', space=smem, size = 0x4, offset = 0x4, fixed_abs, tag = 'smem constant byte address 0x4 - core index']
  #allocation1 [shape = 'u32[144,128]{1,0:T(1,128)}', space=vmem, size = 0x12000, scoped, tag = 'internal scratch']
  %s0 = inlined_call_operand.vmem [shape: f32[144], index: 0, kind: input, shape index: {}]
  %s1 = inlined_call_operand.vmem [shape: f32[2,4,2,10,18], index: 1, kind: input, shape index: {}]
  %s2 = inlined_call_operand.hbm [shape: f32[2,4,16,16], index: 2, kind: output, shape index: {}]
  %s3 = sld [smem:[#allocation0]]
  $region83: #{tpu_custom_call.1} parent=0
    _
  %s5 = ssub.s32 1, %s3
  %s6 = scalar_select 0, %s5, %s3
  $region1: #{tpu_custom_call.1} parent=0
    #allocation2 [shape = 'u8[1024]{0}', space=smem, size = 0x400, scoped, tag = 'input window, operand 0, single buffered']
    #allocation3 [shape = 's32[2]{0}', space=sflag, size = 0x8, scoped, tag = 'scoped memory for tpu_custom_call.1']
    #allocation4 [shape = 's32[2]{0}', space=sflag, size = 0x8, scoped, tag = 'scoped memory for tpu_custom_call.1']
    #allocation5 [shape = 'u8[65536]{0}', space=vmem, size = 0x10000, scoped, tag = 'input window, operand 1']
    #allocation6 [shape = 'u8[32768]{0}', space=vmem, size = 0x8000, scoped, tag = 'output window, operand 0']
    %7 = vsyncpa [#allocation4], 0
    %8 = vsyncpa [#allocation3], 0
    %s9 = scalar_lea.sflag [#allocation3], 1
    %10 = vsyncpa %s9, 0
    loop: start=0, step=1, limit=6
    $region2: #{tpu_custom_call.1} parent=1 // loop_pre_header
      _
    $region3: #{tpu_custom_call.1} parent=1 // loop_header
      %s12 = sphi 0, %s16
      %p13 = scmp.ge.s32.totalorder %s12, 6
      %s19 = sphi 0, %s31
      %s20 = sphi 0, %s27
      %s21 = sphi 0, %s19
      %s22 = sphi 0, %s20
      %s23 = sphi 0, %s21
      %s24 = sphi 0, %s22
      %s32 = sphi 0, %s32
      %s34 = sphi 0, %s32
      %s35 = sphi 0, %s34
      %s49 = sphi 0, %s35
      %s57 = sphi 0, %s59
      %s60 = sphi 0, %s57
      %s61 = sphi 0, %s60
      %s77 = sphi 0, %s61
      %s85 = sphi 0, %s87
      %s88 = sphi 0, %s85
      %s89 = sphi 0, %s88
      %s105 = sphi 0, %s89
    $region4: #{tpu_custom_call.1} parent=1 // loop_header_branch
      %15 = sbr.rel (%p13) target = $region8
    $region5: #{tpu_custom_call.1} parent=1 // loop_body
      %s17 = ssub.s32 %s12, 1
      %s18 = ssub.s32 %s12, 2
      %s25 = sadd.s32 1, %s20
      %p26 = scmp.ge.s32.totalorder %s25, 2
      %s27 = scalar_select %p26, 0, %s25
      %s28 = sadd.s32 1, %s19
      %s29 = scalar_select %p26, %s28, %s19
      %p30 = scmp.ge.s32.totalorder %s29, 2
      %s31 = scalar_select %p30, 0, %s29
      %s33 = sadd.s32 %s32, 1
      %p36 = scmp.eq.s32.totalorder %s12, 3
      %p37 = scmp.ne.s32.totalorder %s32, %s34
      %p38 = scmp.eq.s32.totalorder %s12, 0
      %p39 = por %p37, %p38
      %p40 = scmp.ne.s32.totalorder %s32, %s34
      %p41 = scmp.eq.s32.totalorder %s17, 3
      %p42 = por %p40, %p41
      %p43 = scmp.ne.s32.totalorder %s34, %s35
      %p44 = scmp.eq.s32.totalorder %s17, 0
      %p45 = por %p43, %p44
      %p46 = scmp.ne.s32.totalorder %s34, %s35
      %p47 = scmp.eq.s32.totalorder %s18, 3
      %p48 = por %p46, %p47
      %p50 = scmp.ne.s32.totalorder %s35, %s49
      %p51 = scmp.eq.s32.totalorder %s18, 0
      %p52 = por %p50, %p51
      %s53 = ssub.s32 %s19, %s31
      %s54 = ssub.s32 %s20, %s27
      %s55 = sor.u32 %s53, %s54
      %p56 = scmp.eq.s32.totalorder %s55, 0
      %s58 = sadd.s32 %s57, 1
      %s59 = scalar_select %p56, %s57, %s58
      %p62 = pneg %p56
      %p63 = scmp.eq.s32.totalorder %s12, 3
      %p64 = por %p62, %p63
      %p65 = scmp.ne.s32.totalorder %s57, %s60
      %p66 = scmp.eq.s32.totalorder %s12, 0
      %p67 = por %p65, %p66
      %p68 = scmp.ne.s32.totalorder %s57, %s60
      %p69 = scmp.eq.s32.totalorder %s17, 3
      %p70 = por %p68, %p69
      %p71 = scmp.ne.s32.totalorder %s60, %s61
      %p72 = scmp.eq.s32.totalorder %s17, 0
      %p73 = por %p71, %p72
      %p74 = scmp.ne.s32.totalorder %s60, %s61
      %p75 = scmp.eq.s32.totalorder %s18, 3
      %p76 = por %p74, %p75
      %p78 = scmp.ne.s32.totalorder %s61, %s77
      %p79 = scmp.eq.s32.totalorder %s18, 0
      %p80 = por %p78, %p79
      %s81 = ssub.s32 %s19, %s31
      %s82 = ssub.s32 %s20, %s27
      %s83 = sor.u32 %s81, %s82
      %p84 = scmp.eq.s32.totalorder %s83, 0
      %s86 = sadd.s32 %s85, 1
      %s87 = scalar_select %p84, %s85, %s86
      %p90 = pneg %p84
      %p91 = scmp.eq.s32.totalorder %s12, 3
      %p92 = por %p90, %p91
      %p93 = scmp.ne.s32.totalorder %s85, %s88
      %p94 = scmp.eq.s32.totalorder %s12, 0
      %p95 = por %p93, %p94
      %p96 = scmp.ne.s32.totalorder %s85, %s88
      %p97 = scmp.eq.s32.totalorder %s17, 3
      %p98 = por %p96, %p97
      %p99 = scmp.ne.s32.totalorder %s88, %s89
      %p100 = scmp.eq.s32.totalorder %s17, 0
      %p101 = por %p99, %p100
      %p102 = scmp.ne.s32.totalorder %s88, %s89
      %p103 = scmp.eq.s32.totalorder %s18, 3
      %p104 = por %p102, %p103
      %p106 = scmp.ne.s32.totalorder %s89, %s105
      %p107 = scmp.eq.s32.totalorder %s18, 0
      %p108 = por %p106, %p107
      %p109 = scmp.le.s32.totalorder 1, %s12
      %p110 = scmp.lt.s32.totalorder %s12, 5
      %p111 = pnand %p109, %p110
      %p112 = pneg %p111
      // Predicated region
      $region9: #{tpu_custom_call.1} parent=5 // pred_check
        _
      $region10: #{tpu_custom_call.1} parent=5 // pred_check_branch
        %114 = sbr.rel (%p111) target = $region12
      $region11: #{tpu_custom_call.1} parent=5 // pred_region
        %s115 = ssub.s32 %s12, 1
        // Predicated region
        $region13: #{tpu_custom_call.1} parent=11 // pred_check
          %p116 = pneg %p45
        $region14: #{tpu_custom_call.1} parent=11 // pred_check_branch
          %118 = sbr.rel (%p116) target = $region16
        $region15: #{tpu_custom_call.1} parent=11 // pred_region
          %s120 = ssub.s32 32, 32
          %121 = vsyncadd [#allocation4], %s120
          %s123 = sshll.u32 %s0, 4
          %s124 = int_to_ptr.vmem [resolvable:$true] %s123
          %126 = dma.vmem_to_smem %s124, 32, [#allocation2], [#allocation4]
        $region16: #{tpu_custom_call.1} parent=11 // pred_fallthru
          _
      $region12: #{tpu_custom_call.1} parent=5 // pred_fallthru
        _
      %p127 = scmp.lt.s32.totalorder %s12, 4
      // Predicated region
      $region17: #{tpu_custom_call.1} parent=5 // pred_check
        %p128 = pneg %p127
      $region18: #{tpu_custom_call.1} parent=5 // pred_check_branch
        %130 = sbr.rel (%p128) target = $region20
      $region19: #{tpu_custom_call.1} parent=5 // pred_region
        // Predicated region
        $region21: #{tpu_custom_call.1} parent=19 // pred_check
          %p131 = pneg %p67
        $region22: #{tpu_custom_call.1} parent=19 // pred_check_branch
          %133 = sbr.rel (%p131) target = $region24
        $region23: #{tpu_custom_call.1} parent=19 // pred_region
          %s134 = sand.u32 %s57, 1
          %s135 = sand.u32 %s57, 1
          %s136 = smul.addr %s135, 64
          %s137 = scalar_lea.vmem [#allocation5], %s136
          %s138 = smul.addr %s20, 2
          %s139 = smul.addr %s19, 16
          %s140 = sadd.s32 %s138, %s139
          %s141 = smul.addr %s140, 8
          %s142 = scalar_lea.vmem %s1, %s141
          // Predicated region
          $region25: #{tpu_custom_call.1} parent=23 // pred_check
            _
          $region26: #{tpu_custom_call.1} parent=23 // pred_check_branch
            %144 = sbr.rel (0) target = $region28
          $region27: #{tpu_custom_call.1} parent=23 // pred_region
            // Predicated region
            $region29: #{tpu_custom_call.1} parent=27 // pred_check
              _
            $region30: #{tpu_custom_call.1} parent=27 // pred_check_branch
              %146 = sbr.rel (0) target = $region32
            $region31: #{tpu_custom_call.1} parent=27 // pred_region
              // Predicated region
              $region44: #{tpu_custom_call.1} parent=31 // pred_check
                _
              $region45: #{tpu_custom_call.1} parent=31 // pred_check_branch
                %176 = sbr.rel (0) target = $region47
              $region46: #{tpu_custom_call.1} parent=31 // pred_region
                loop: start=0, step=1, limit=1
                $region48: #{tpu_custom_call.1} parent=46 // loop_pre_header
                  _
                $region49: #{tpu_custom_call.1} parent=46 // loop_header
                  %s178 = sphi 0, %s182
                  %p179 = scmp.ge.s32.totalorder %s178, 1
                  %s183 = sphi %s142, %s142
                  %s184 = sphi %s137, %s137
                $region50: #{tpu_custom_call.1} parent=46 // loop_header_branch
                  %181 = sbr.rel (%p179) target = $region54
                $region51: #{tpu_custom_call.1} parent=46 // loop_body
                  %v185 = vld [vmem:[%s183] sm:$0xff]
                  %186 = vst [vmem:[%s184] sm:$0xff] %v185
                  %v187 = vld [vmem:[%s183 + $0x8] sm:$0xff]
                  %188 = vst [vmem:[%s184 + $0x8] sm:$0xff] %v187
                  %v189 = vld [vmem:[%s183 + $0x20] sm:$0xff]
                  %190 = vst [vmem:[%s184 + $0x10] sm:$0xff] %v189
                  %v191 = vld [vmem:[%s183 + $0x28] sm:$0xff]
                  %192 = vst [vmem:[%s184 + $0x18] sm:$0xff] %v191
                  %v193 = vld [vmem:[%s183 + $0x40] sm:$0xff]
                  %194 = vst [vmem:[%s184 + $0x20] sm:$0xff] %v193
                  %v195 = vld [vmem:[%s183 + $0x48] sm:$0xff]
                  %196 = vst [vmem:[%s184 + $0x28] sm:$0xff] %v195
                  %v197 = vld [vmem:[%s183 + $0x60] sm:$0xff]
                  %198 = vst [vmem:[%s184 + $0x30] sm:$0xff] %v197
                  %v199 = vld [vmem:[%s183 + $0x68] sm:$0xff]
                  %200 = vst [vmem:[%s184 + $0x38] sm:$0xff] %v199
                $region52: #{tpu_custom_call.1} parent=46 // loop_footer
                  %s182 = sadd.s32 1, %s178
                $region53: #{tpu_custom_call.1} parent=46 // loop_footer_branch
                  %177 = sbr.rel target = $region49
                $region54: #{tpu_custom_call.1} parent=46 // loop_exit
                  _
              $region47: #{tpu_custom_call.1} parent=31 // pred_fallthru
                _
              // Predicated region
              $region55: #{tpu_custom_call.1} parent=31 // pred_check
                _
              $region56: #{tpu_custom_call.1} parent=31 // pred_check_branch
                %202 = sbr.rel target = $region58
              $region57: #{tpu_custom_call.1} parent=31 // pred_region
                _
              $region58: #{tpu_custom_call.1} parent=31 // pred_fallthru
                _
            $region32: #{tpu_custom_call.1} parent=27 // pred_fallthru
              _
            // Predicated region
            $region33: #{tpu_custom_call.1} parent=27 // pred_check
              _
            $region34: #{tpu_custom_call.1} parent=27 // pred_check_branch
              %148 = sbr.rel target = $region36
            $region35: #{tpu_custom_call.1} parent=27 // pred_region
              %s150 = ssub.s32 256, 1
              loop: start=0, step=1, limit=1
              $region37: #{tpu_custom_call.1} parent=35 // loop_pre_header
                _
              $region38: #{tpu_custom_call.1} parent=35 // loop_header
                %s152 = sphi 0, %s156
                %p153 = scmp.ge.s32.totalorder %s152, 1
                %s157 = sphi %s142, %s142
                %s158 = sphi %s137, %s137
              $region39: #{tpu_custom_call.1} parent=35 // loop_header_branch
                %155 = sbr.rel (%p153) target = $region43
              $region40: #{tpu_custom_call.1} parent=35 // loop_body
                %v159 = vld [vmem:[%s157] sm:%s150]
                %160 = vst [vmem:[%s158] sm:%s150] %v159
                %v161 = vld [vmem:[%s157 + $0x8] sm:%s150]
                %162 = vst [vmem:[%s158 + $0x8] sm:%s150] %v161
                %v163 = vld [vmem:[%s157 + $0x20] sm:%s150]
                %164 = vst [vmem:[%s158 + $0x10] sm:%s150] %v163
                %v165 = vld [vmem:[%s157 + $0x28] sm:%s150]
                %166 = vst [vmem:[%s158 + $0x18] sm:%s150] %v165
                %v167 = vld [vmem:[%s157 + $0x40] sm:%s150]
                %168 = vst [vmem:[%s158 + $0x20] sm:%s150] %v167
                %v169 = vld [vmem:[%s157 + $0x48] sm:%s150]
                %170 = vst [vmem:[%s158 + $0x28] sm:%s150] %v169
                %v171 = vld [vmem:[%s157 + $0x60] sm:%s150]
                %172 = vst [vmem:[%s158 + $0x30] sm:%s150] %v171
                %v173 = vld [vmem:[%s157 + $0x68] sm:%s150]
                %174 = vst [vmem:[%s158 + $0x38] sm:%s150] %v173
              $region41: #{tpu_custom_call.1} parent=35 // loop_footer
                %s156 = sadd.s32 1, %s152
              $region42: #{tpu_custom_call.1} parent=35 // loop_footer_branch
                %151 = sbr.rel target = $region38
              $region43: #{tpu_custom_call.1} parent=35 // loop_exit
                _
            $region36: #{tpu_custom_call.1} parent=27 // pred_fallthru
              _
          $region28: #{tpu_custom_call.1} parent=23 // pred_fallthru
            _
          %203 = vnop
        $region24: #{tpu_custom_call.1} parent=19 // pred_fallthru
          _
      $region20: #{tpu_custom_call.1} parent=5 // pred_fallthru
        _
      %p204 = scmp.le.s32.totalorder 1, %s12
      %p205 = scmp.lt.s32.totalorder %s12, 5
      %p206 = pnand %p204, %p205
      %p207 = pneg %p206
      // Predicated region
      $region59: #{tpu_custom_call.1} parent=5 // pred_check
        _
      $region60: #{tpu_custom_call.1} parent=5 // pred_check_branch
        %209 = sbr.rel (%p206) target = $region62
      $region61: #{tpu_custom_call.1} parent=5 // pred_region
        %s210 = ssub.s32 %s12, 1
        // Predicated region
        $region63: #{tpu_custom_call.1} parent=61 // pred_check
          %p211 = pneg %p45
        $region64: #{tpu_custom_call.1} parent=61 // pred_check_branch
          %213 = sbr.rel (%p211) target = $region66
        $region65: #{tpu_custom_call.1} parent=61 // pred_region
          %214 = dma.done [#allocation4], 32
        $region66: #{tpu_custom_call.1} parent=61 // pred_fallthru
          _
        %s215 = sand.u32 %s60, 1
        %s216 = sand.u32 %s60, 1
        %s217 = smul.addr %s216, 64
        %s218 = scalar_lea.vmem [#allocation5], %s217
        // Predicated region
        $region67: #{tpu_custom_call.1} parent=61 // pred_check
          %p219 = pneg %p73
        $region68: #{tpu_custom_call.1} parent=61 // pred_check_branch
          %221 = sbr.rel (%p219) target = $region70
        $region69: #{tpu_custom_call.1} parent=61 // pred_region
          _
        $region70: #{tpu_custom_call.1} parent=61 // pred_fallthru
          _
        %222 = sfence
        %p223 = pneg %p45
        %p224 = pneg %p42
        %s225 = sand.u32 %s60, 1
        %s226 = sand.u32 %s60, 1
        %s227 = smul.addr %s226, 64
        %s228 = scalar_lea.vmem [#allocation5], %s227
        %p229 = pneg %p73
        %p230 = pneg %p70
        %p231 = pneg %p101
        %p232 = pneg %p98
        %s233 = sand.u32 %s88, 1
        %s234 = scalar_lea.sflag [#allocation3], %s233
        %s235 = sand.u32 %s88, 1
        %s236 = smul.addr %s235, 32
        %s237 = scalar_lea.vmem [#allocation6], %s236
        %v238 = vld [vmem:[%s218] sm:$0xff]
        %s239 = sld [smem:[#allocation2]]
        %v240 = vstv %s239
        %v241 = vmul.f32 %v240, %v238
        %v242 = vadd.f32 %v241, 0.0
        %s243 = sld [smem:[#allocation2 + $0x24]]
        %v244 = vstv %s243
        %v245 = vmul.f32 %v244, %v238
        %v246 = vadd.f32 %v245, 0.0
        %s247 = sld [smem:[#allocation2 + $0x48]]
        %v248 = vstv %s247
        %v249 = vmul.f32 %v248, %v238
        %v250 = vadd.f32 %v249, 0.0
        %s251 = sld [smem:[#allocation2 + $0x6c]]
        %v252 = vstv %s251
        %v253 = vmul.f32 %v252, %v238
        %v254 = vadd.f32 %v253, 0.0
        %s255 = sld [smem:[#allocation2 + $0x1]]
        %v256 = vstv %s255
        %v257 = vmul.f32 %v256, %v238
        %259 = vrot.lane.b32.xlu0 %v257, 127
        %v260 = vpop.permute.xlu0 %259
        %v262 = vadd.f32 %v242, %v260
        %s263 = sld [smem:[#allocation2 + $0x25]]
        %v264 = vstv %s263
        %v265 = vmul.f32 %v264, %v238
        %267 = vrot.lane.b32.xlu0 %v265, 127
        %v268 = vpop.permute.xlu0 %267
        %v270 = vadd.f32 %v246, %v268
        %s271 = sld [smem:[#allocation2 + $0x49]]
        %v272 = vstv %s271
        %v273 = vmul.f32 %v272, %v238
        %275 = vrot.lane.b32.xlu0 %v273, 127
        %v276 = vpop.permute.xlu0 %275
        %v278 = vadd.f32 %v250, %v276
        %s279 = sld [smem:[#allocation2 + $0x6d]]
        %v280 = vstv %s279
        %v281 = vmul.f32 %v280, %v238
        %283 = vrot.lane.b32.xlu0 %v281, 127
        %v284 = vpop.permute.xlu0 %283
        %v286 = vadd.f32 %v254, %v284
        %s287 = sld [smem:[#allocation2 + $0x2]]
        %v288 = vstv %s287
        %v289 = vmul.f32 %v288, %v238
        %291 = vrot.lane.b32.xlu0 %v289, 126
        %v292 = vpop.permute.xlu0 %291
        %v294 = vadd.f32 %v262, %v292
        %s295 = sld [smem:[#allocation2 + $0x26]]
        %v296 = vstv %s295
        %v297 = vmul.f32 %v296, %v238
        %299 = vrot.lane.b32.xlu0 %v297, 126
        %v300 = vpop.permute.xlu0 %299
        %v302 = vadd.f32 %v270, %v300
        %s303 = sld [smem:[#allocation2 + $0x4a]]
        %v304 = vstv %s303
        %v305 = vmul.f32 %v304, %v238
        %307 = vrot.lane.b32.xlu0 %v305, 126
        %v308 = vpop.permute.xlu0 %307
        %v310 = vadd.f32 %v278, %v308
        %s311 = sld [smem:[#allocation2 + $0x6e]]
        %v312 = vstv %s311
        %v313 = vmul.f32 %v312, %v238
        %315 = vrot.lane.b32.xlu0 %v313, 126
        %v316 = vpop.permute.xlu0 %315
        %v318 = vadd.f32 %v286, %v316
        %v319 = vld [vmem:[%s218 + $0x1] sm:$0xff]
        %s320 = sld [smem:[#allocation2 + $0x3]]
        %v321 = vstv %s320
        %v322 = vmul.f32 %v321, %v319
        %v323 = vadd.f32 %v294, %v322
        %s324 = sld [smem:[#allocation2 + $0x27]]
        %v325 = vstv %s324
        %v326 = vmul.f32 %v325, %v319
        %v327 = vadd.f32 %v302, %v326
        %s328 = sld [smem:[#allocation2 + $0x4b]]
        %v329 = vstv %s328
        %v330 = vmul.f32 %v329, %v319
        %v331 = vadd.f32 %v310, %v330
        %s332 = sld [smem:[#allocation2 + $0x6f]]
        %v333 = vstv %s332
        %v334 = vmul.f32 %v333, %v319
        %v335 = vadd.f32 %v318, %v334
        %s336 = sld [smem:[#allocation2 + $0x4]]
        %v337 = vstv %s336
        %v338 = vmul.f32 %v337, %v319
        %340 = vrot.lane.b32.xlu0 %v338, 127
        %v341 = vpop.permute.xlu0 %340
        %v343 = vadd.f32 %v323, %v341
        %s344 = sld [smem:[#allocation2 + $0x28]]
        %v345 = vstv %s344
        %v346 = vmul.f32 %v345, %v319
        %348 = vrot.lane.b32.xlu0 %v346, 127
        %v349 = vpop.permute.xlu0 %348
        %v351 = vadd.f32 %v327, %v349
        %s352 = sld [smem:[#allocation2 + $0x4c]]
        %v353 = vstv %s352
        %v354 = vmul.f32 %v353, %v319
        %356 = vrot.lane.b32.xlu0 %v354, 127
        %v357 = vpop.permute.xlu0 %356
        %v359 = vadd.f32 %v331, %v357
        %s360 = sld [smem:[#allocation2 + $0x70]]
        %v361 = vstv %s360
        %v362 = vmul.f32 %v361, %v319
        %364 = vrot.lane.b32.xlu0 %v362, 127
        %v365 = vpop.permute.xlu0 %364
        %v367 = vadd.f32 %v335, %v365
        %s368 = sld [smem:[#allocation2 + $0x5]]
        %v369 = vstv %s368
        %v370 = vmul.f32 %v369, %v319
        %372 = vrot.lane.b32.xlu0 %v370, 126
        %v373 = vpop.permute.xlu0 %372
        %v375 = vadd.f32 %v343, %v373
        %s376 = sld [smem:[#allocation2 + $0x29]]
        %v377 = vstv %s376
        %v378 = vmul.f32 %v377, %v319
        %380 = vrot.lane.b32.xlu0 %v378, 126
        %v381 = vpop.permute.xlu0 %380
        %v383 = vadd.f32 %v351, %v381
        %s384 = sld [smem:[#allocation2 + $0x4d]]
        %v385 = vstv %s384
        %v386 = vmul.f32 %v385, %v319
        %388 = vrot.lane.b32.xlu0 %v386, 126
        %v389 = vpop.permute.xlu0 %388
        %v391 = vadd.f32 %v359, %v389
        %s392 = sld [smem:[#allocation2 + $0x71]]
        %v393 = vstv %s392
        %v394 = vmul.f32 %v393, %v319
        %396 = vrot.lane.b32.xlu0 %v394, 126
        %v397 = vpop.permute.xlu0 %396
        %v399 = vadd.f32 %v367, %v397
        %v400 = vld [vmem:[%s218 + $0x2] sm:$0xff]
        %s401 = sld [smem:[#allocation2 + $0x6]]
        %v402 = vstv %s401
        %v403 = vmul.f32 %v402, %v400
        %v404 = vadd.f32 %v375, %v403
        %s405 = sld [smem:[#allocation2 + $0x2a]]
        %v406 = vstv %s405
        %v407 = vmul.f32 %v406, %v400
        %v408 = vadd.f32 %v383, %v407
        %s409 = sld [smem:[#allocation2 + $0x4e]]
        %v410 = vstv %s409
        %v411 = vmul.f32 %v410, %v400
        %v412 = vadd.f32 %v391, %v411
        %s413 = sld [smem:[#allocation2 + $0x72]]
        %v414 = vstv %s413
        %v415 = vmul.f32 %v414, %v400
        %v416 = vadd.f32 %v399, %v415
        %s417 = sld [smem:[#allocation2 + $0x7]]
        %v418 = vstv %s417
        %v419 = vmul.f32 %v418, %v400
        %421 = vrot.lane.b32.xlu0 %v419, 127
        %v422 = vpop.permute.xlu0 %421
        %v424 = vadd.f32 %v404, %v422
        %s425 = sld [smem:[#allocation2 + $0x2b]]
        %v426 = vstv %s425
        %v427 = vmul.f32 %v426, %v400
        %429 = vrot.lane.b32.xlu0 %v427, 127
        %v430 = vpop.permute.xlu0 %429
        %v432 = vadd.f32 %v408, %v430
        %s433 = sld [smem:[#allocation2 + $0x4f]]
        %v434 = vstv %s433
        %v435 = vmul.f32 %v434, %v400
        %437 = vrot.lane.b32.xlu0 %v435, 127
        %v438 = vpop.permute.xlu0 %437
        %v440 = vadd.f32 %v412, %v438
        %s441 = sld [smem:[#allocation2 + $0x73]]
        %v442 = vstv %s441
        %v443 = vmul.f32 %v442, %v400
        %445 = vrot.lane.b32.xlu0 %v443, 127
        %v446 = vpop.permute.xlu0 %445
        %v448 = vadd.f32 %v416, %v446
        %s449 = sld [smem:[#allocation2 + $0x8]]
        %v450 = vstv %s449
        %v451 = vmul.f32 %v450, %v400
        %453 = vrot.lane.b32.xlu0 %v451, 126
        %v454 = vpop.permute.xlu0 %453
        %v456 = vadd.f32 %v424, %v454
        %s457 = sld [smem:[#allocation2 + $0x2c]]
        %v458 = vstv %s457
        %v459 = vmul.f32 %v458, %v400
        %461 = vrot.lane.b32.xlu0 %v459, 126
        %v462 = vpop.permute.xlu0 %461
        %v464 = vadd.f32 %v432, %v462
        %s465 = sld [smem:[#allocation2 + $0x50]]
        %v466 = vstv %s465
        %v467 = vmul.f32 %v466, %v400
        %469 = vrot.lane.b32.xlu0 %v467, 126
        %v470 = vpop.permute.xlu0 %469
        %v472 = vadd.f32 %v440, %v470
        %s473 = sld [smem:[#allocation2 + $0x74]]
        %v474 = vstv %s473
        %v475 = vmul.f32 %v474, %v400
        %477 = vrot.lane.b32.xlu0 %v475, 126
        %v478 = vpop.permute.xlu0 %477
        %v480 = vadd.f32 %v448, %v478
        %s481 = scalar_lea.vmem %s218, 16 [#allocation5]
        %v482 = vld [vmem:[%s481] sm:$0xff]
        %s483 = sld [smem:[#allocation2 + $0x9]]
        %v484 = vstv %s483
        %v485 = vmul.f32 %v484, %v482
        %v486 = vadd.f32 %v456, %v485
        %s487 = sld [smem:[#allocation2 + $0x2d]]
        %v488 = vstv %s487
        %v489 = vmul.f32 %v488, %v482
        %v490 = vadd.f32 %v464, %v489
        %s491 = sld [smem:[#allocation2 + $0x51]]
        %v492 = vstv %s491
        %v493 = vmul.f32 %v492, %v482
        %v494 = vadd.f32 %v472, %v493
        %s495 = sld [smem:[#allocation2 + $0x75]]
        %v496 = vstv %s495
        %v497 = vmul.f32 %v496, %v482
        %v498 = vadd.f32 %v480, %v497
        %s499 = sld [smem:[#allocation2 + $0xa]]
        %v500 = vstv %s499
        %v501 = vmul.f32 %v500, %v482
        %503 = vrot.lane.b32.xlu0 %v501, 127
        %v504 = vpop.permute.xlu0 %503
        %v506 = vadd.f32 %v486, %v504
        %s507 = sld [smem:[#allocation2 + $0x2e]]
        %v508 = vstv %s507
        %v509 = vmul.f32 %v508, %v482
        %511 = vrot.lane.b32.xlu0 %v509, 127
        %v512 = vpop.permute.xlu0 %511
        %v514 = vadd.f32 %v490, %v512
        %s515 = sld [smem:[#allocation2 + $0x52]]
        %v516 = vstv %s515
        %v517 = vmul.f32 %v516, %v482
        %519 = vrot.lane.b32.xlu0 %v517, 127
        %v520 = vpop.permute.xlu0 %519
        %v522 = vadd.f32 %v494, %v520
        %s523 = sld [smem:[#allocation2 + $0x76]]
        %v524 = vstv %s523
        %v525 = vmul.f32 %v524, %v482
        %527 = vrot.lane.b32.xlu0 %v525, 127
        %v528 = vpop.permute.xlu0 %527
        %v530 = vadd.f32 %v498, %v528
        %s531 = sld [smem:[#allocation2 + $0xb]]
        %v532 = vstv %s531
        %v533 = vmul.f32 %v532, %v482
        %535 = vrot.lane.b32.xlu0 %v533, 126
        %v536 = vpop.permute.xlu0 %535
        %v538 = vadd.f32 %v506, %v536
        %s539 = sld [smem:[#allocation2 + $0x2f]]
        %v540 = vstv %s539
        %v541 = vmul.f32 %v540, %v482
        %543 = vrot.lane.b32.xlu0 %v541, 126
        %v544 = vpop.permute.xlu0 %543
        %v546 = vadd.f32 %v514, %v544
        %s547 = sld [smem:[#allocation2 + $0x53]]
        %v548 = vstv %s547
        %v549 = vmul.f32 %v548, %v482
        %551 = vrot.lane.b32.xlu0 %v549, 126
        %v552 = vpop.permute.xlu0 %551
        %v554 = vadd.f32 %v522, %v552
        %s555 = sld [smem:[#allocation2 + $0x77]]
        %v556 = vstv %s555
        %v557 = vmul.f32 %v556, %v482
        %559 = vrot.lane.b32.xlu0 %v557, 126
        %v560 = vpop.permute.xlu0 %559
        %v562 = vadd.f32 %v530, %v560
        %v563 = vld [vmem:[%s481 + $0x1] sm:$0xff]
        %s564 = sld [smem:[#allocation2 + $0xc]]
        %v565 = vstv %s564
        %v566 = vmul.f32 %v565, %v563
        %v567 = vadd.f32 %v538, %v566
        %s568 = sld [smem:[#allocation2 + $0x30]]
        %v569 = vstv %s568
        %v570 = vmul.f32 %v569, %v563
        %v571 = vadd.f32 %v546, %v570
        %s572 = sld [smem:[#allocation2 + $0x54]]
        %v573 = vstv %s572
        %v574 = vmul.f32 %v573, %v563
        %v575 = vadd.f32 %v554, %v574
        %s576 = sld [smem:[#allocation2 + $0x78]]
        %v577 = vstv %s576
        %v578 = vmul.f32 %v577, %v563
        %v579 = vadd.f32 %v562, %v578
        %s580 = sld [smem:[#allocation2 + $0xd]]
        %v581 = vstv %s580
        %v582 = vmul.f32 %v581, %v563
        %584 = vrot.lane.b32.xlu0 %v582, 127
        %v585 = vpop.permute.xlu0 %584
        %v587 = vadd.f32 %v567, %v585
        %s588 = sld [smem:[#allocation2 + $0x31]]
        %v589 = vstv %s588
        %v590 = vmul.f32 %v589, %v563
        %592 = vrot.lane.b32.xlu0 %v590, 127
        %v593 = vpop.permute.xlu0 %592
        %v595 = vadd.f32 %v571, %v593
        %s596 = sld [smem:[#allocation2 + $0x55]]
        %v597 = vstv %s596
        %v598 = vmul.f32 %v597, %v563
        %600 = vrot.lane.b32.xlu0 %v598, 127
        %v601 = vpop.permute.xlu0 %600
        %v603 = vadd.f32 %v575, %v601
        %s604 = sld [smem:[#allocation2 + $0x79]]
        %v605 = vstv %s604
        %v606 = vmul.f32 %v605, %v563
        %608 = vrot.lane.b32.xlu0 %v606, 127
        %v609 = vpop.permute.xlu0 %608
        %v611 = vadd.f32 %v579, %v609
        %s612 = sld [smem:[#allocation2 + $0xe]]
        %v613 = vstv %s612
        %v614 = vmul.f32 %v613, %v563
        %616 = vrot.lane.b32.xlu0 %v614, 126
        %v617 = vpop.permute.xlu0 %616
        %v619 = vadd.f32 %v587, %v617
        %s620 = sld [smem:[#allocation2 + $0x32]]
        %v621 = vstv %s620
        %v622 = vmul.f32 %v621, %v563
        %624 = vrot.lane.b32.xlu0 %v622, 126
        %v625 = vpop.permute.xlu0 %624
        %v627 = vadd.f32 %v595, %v625
        %s628 = sld [smem:[#allocation2 + $0x56]]
        %v629 = vstv %s628
        %v630 = vmul.f32 %v629, %v563
        %632 = vrot.lane.b32.xlu0 %v630, 126
        %v633 = vpop.permute.xlu0 %632
        %v635 = vadd.f32 %v603, %v633
        %s636 = sld [smem:[#allocation2 + $0x7a]]
        %v637 = vstv %s636
        %v638 = vmul.f32 %v637, %v563
        %640 = vrot.lane.b32.xlu0 %v638, 126
        %v641 = vpop.permute.xlu0 %640
        %v643 = vadd.f32 %v611, %v641
        %v644 = vld [vmem:[%s481 + $0x2] sm:$0xff]
        %s645 = sld [smem:[#allocation2 + $0xf]]
        %v646 = vstv %s645
        %v647 = vmul.f32 %v646, %v644
        %v648 = vadd.f32 %v619, %v647
        %s649 = sld [smem:[#allocation2 + $0x33]]
        %v650 = vstv %s649
        %v651 = vmul.f32 %v650, %v644
        %v652 = vadd.f32 %v627, %v651
        %s653 = sld [smem:[#allocation2 + $0x57]]
        %v654 = vstv %s653
        %v655 = vmul.f32 %v654, %v644
        %v656 = vadd.f32 %v635, %v655
        %s657 = sld [smem:[#allocation2 + $0x7b]]
        %v658 = vstv %s657
        %v659 = vmul.f32 %v658, %v644
        %v660 = vadd.f32 %v643, %v659
        %s661 = sld [smem:[#allocation2 + $0x10]]
        %v662 = vstv %s661
        %v663 = vmul.f32 %v662, %v644
        %665 = vrot.lane.b32.xlu0 %v663, 127
        %v666 = vpop.permute.xlu0 %665
        %v668 = vadd.f32 %v648, %v666
        %s669 = sld [smem:[#allocation2 + $0x34]]
        %v670 = vstv %s669
        %v671 = vmul.f32 %v670, %v644
        %673 = vrot.lane.b32.xlu0 %v671, 127
        %v674 = vpop.permute.xlu0 %673
        %v676 = vadd.f32 %v652, %v674
        %s677 = sld [smem:[#allocation2 + $0x58]]
        %v678 = vstv %s677
        %v679 = vmul.f32 %v678, %v644
        %681 = vrot.lane.b32.xlu0 %v679, 127
        %v682 = vpop.permute.xlu0 %681
        %v684 = vadd.f32 %v656, %v682
        %s685 = sld [smem:[#allocation2 + $0x7c]]
        %v686 = vstv %s685
        %v687 = vmul.f32 %v686, %v644
        %689 = vrot.lane.b32.xlu0 %v687, 127
        %v690 = vpop.permute.xlu0 %689
        %v692 = vadd.f32 %v660, %v690
        %s693 = sld [smem:[#allocation2 + $0x11]]
        %v694 = vstv %s693
        %v695 = vmul.f32 %v694, %v644
        %697 = vrot.lane.b32.xlu0 %v695, 126
        %v698 = vpop.permute.xlu0 %697
        %v700 = vadd.f32 %v668, %v698
        %s701 = sld [smem:[#allocation2 + $0x35]]
        %v702 = vstv %s701
        %v703 = vmul.f32 %v702, %v644
        %705 = vrot.lane.b32.xlu0 %v703, 126
        %v706 = vpop.permute.xlu0 %705
        %v708 = vadd.f32 %v676, %v706
        %s709 = sld [smem:[#allocation2 + $0x59]]
        %v710 = vstv %s709
        %v711 = vmul.f32 %v710, %v644
        %713 = vrot.lane.b32.xlu0 %v711, 126
        %v714 = vpop.permute.xlu0 %713
        %v716 = vadd.f32 %v684, %v714
        %s717 = sld [smem:[#allocation2 + $0x7d]]
        %v718 = vstv %s717
        %v719 = vmul.f32 %v718, %v644
        %721 = vrot.lane.b32.xlu0 %v719, 126
        %v722 = vpop.permute.xlu0 %721
        %v724 = vadd.f32 %v692, %v722
        %s725 = scalar_lea.vmem %s218, 32 [#allocation5]
        %v726 = vld [vmem:[%s725] sm:$0xff]
        %s727 = sld [smem:[#allocation2 + $0x12]]
        %v728 = vstv %s727
        %v729 = vmul.f32 %v728, %v726
        %v730 = vadd.f32 %v700, %v729
        %s731 = sld [smem:[#allocation2 + $0x36]]
        %v732 = vstv %s731
        %v733 = vmul.f32 %v732, %v726
        %v734 = vadd.f32 %v708, %v733
        %s735 = sld [smem:[#allocation2 + $0x5a]]
        %v736 = vstv %s735
        %v737 = vmul.f32 %v736, %v726
        %v738 = vadd.f32 %v716, %v737
        %s739 = sld [smem:[#allocation2 + $0x7e]]
        %v740 = vstv %s739
        %v741 = vmul.f32 %v740, %v726
        %v742 = vadd.f32 %v724, %v741
        %s743 = sld [smem:[#allocation2 + $0x13]]
        %v744 = vstv %s743
        %v745 = vmul.f32 %v744, %v726
        %747 = vrot.lane.b32.xlu0 %v745, 127
        %v748 = vpop.permute.xlu0 %747
        %v750 = vadd.f32 %v730, %v748
        %s751 = sld [smem:[#allocation2 + $0x37]]
        %v752 = vstv %s751
        %v753 = vmul.f32 %v752, %v726
        %755 = vrot.lane.b32.xlu0 %v753, 127
        %v756 = vpop.permute.xlu0 %755
        %v758 = vadd.f32 %v734, %v756
        %s759 = sld [smem:[#allocation2 + $0x5b]]
        %v760 = vstv %s759
        %v761 = vmul.f32 %v760, %v726
        %763 = vrot.lane.b32.xlu0 %v761, 127
        %v764 = vpop.permute.xlu0 %763
        %v766 = vadd.f32 %v738, %v764
        %s767 = sld [smem:[#allocation2 + $0x7f]]
        %v768 = vstv %s767
        %v769 = vmul.f32 %v768, %v726
        %771 = vrot.lane.b32.xlu0 %v769, 127
        %v772 = vpop.permute.xlu0 %771
        %v774 = vadd.f32 %v742, %v772
        %s775 = sld [smem:[#allocation2 + $0x14]]
        %v776 = vstv %s775
        %v777 = vmul.f32 %v776, %v726
        %779 = vrot.lane.b32.xlu0 %v777, 126
        %v780 = vpop.permute.xlu0 %779
        %v782 = vadd.f32 %v750, %v780
        %s783 = sld [smem:[#allocation2 + $0x38]]
        %v784 = vstv %s783
        %v785 = vmul.f32 %v784, %v726
        %787 = vrot.lane.b32.xlu0 %v785, 126
        %v788 = vpop.permute.xlu0 %787
        %v790 = vadd.f32 %v758, %v788
        %s791 = sld [smem:[#allocation2 + $0x5c]]
        %v792 = vstv %s791
        %v793 = vmul.f32 %v792, %v726
        %795 = vrot.lane.b32.xlu0 %v793, 126
        %v796 = vpop.permute.xlu0 %795
        %v798 = vadd.f32 %v766, %v796
        %s799 = sld [smem:[#allocation2 + $0x80]]
        %v800 = vstv %s799
        %v801 = vmul.f32 %v800, %v726
        %803 = vrot.lane.b32.xlu0 %v801, 126
        %v804 = vpop.permute.xlu0 %803
        %v806 = vadd.f32 %v774, %v804
        %v807 = vld [vmem:[%s725 + $0x1] sm:$0xff]
        %s808 = sld [smem:[#allocation2 + $0x15]]
        %v809 = vstv %s808
        %v810 = vmul.f32 %v809, %v807
        %v811 = vadd.f32 %v782, %v810
        %s812 = sld [smem:[#allocation2 + $0x39]]
        %v813 = vstv %s812
        %v814 = vmul.f32 %v813, %v807
        %v815 = vadd.f32 %v790, %v814
        %s816 = sld [smem:[#allocation2 + $0x5d]]
        %v817 = vstv %s816
        %v818 = vmul.f32 %v817, %v807
        %v819 = vadd.f32 %v798, %v818
        %s820 = sld [smem:[#allocation2 + $0x81]]
        %v821 = vstv %s820
        %v822 = vmul.f32 %v821, %v807
        %v823 = vadd.f32 %v806, %v822
        %s824 = sld [smem:[#allocation2 + $0x16]]
        %v825 = vstv %s824
        %v826 = vmul.f32 %v825, %v807
        %828 = vrot.lane.b32.xlu0 %v826, 127
        %v829 = vpop.permute.xlu0 %828
        %v831 = vadd.f32 %v811, %v829
        %s832 = sld [smem:[#allocation2 + $0x3a]]
        %v833 = vstv %s832
        %v834 = vmul.f32 %v833, %v807
        %836 = vrot.lane.b32.xlu0 %v834, 127
        %v837 = vpop.permute.xlu0 %836
        %v839 = vadd.f32 %v815, %v837
        %s840 = sld [smem:[#allocation2 + $0x5e]]
        %v841 = vstv %s840
        %v842 = vmul.f32 %v841, %v807
        %844 = vrot.lane.b32.xlu0 %v842, 127
        %v845 = vpop.permute.xlu0 %844
        %v847 = vadd.f32 %v819, %v845
        %s848 = sld [smem:[#allocation2 + $0x82]]
        %v849 = vstv %s848
        %v850 = vmul.f32 %v849, %v807
        %852 = vrot.lane.b32.xlu0 %v850, 127
        %v853 = vpop.permute.xlu0 %852
        %v855 = vadd.f32 %v823, %v853
        %s856 = sld [smem:[#allocation2 + $0x17]]
        %v857 = vstv %s856
        %v858 = vmul.f32 %v857, %v807
        %860 = vrot.lane.b32.xlu0 %v858, 126
        %v861 = vpop.permute.xlu0 %860
        %v863 = vadd.f32 %v831, %v861
        %s864 = sld [smem:[#allocation2 + $0x3b]]
        %v865 = vstv %s864
        %v866 = vmul.f32 %v865, %v807
        %868 = vrot.lane.b32.xlu0 %v866, 126
        %v869 = vpop.permute.xlu0 %868
        %v871 = vadd.f32 %v839, %v869
        %s872 = sld [smem:[#allocation2 + $0x5f]]
        %v873 = vstv %s872
        %v874 = vmul.f32 %v873, %v807
        %876 = vrot.lane.b32.xlu0 %v874, 126
        %v877 = vpop.permute.xlu0 %876
        %v879 = vadd.f32 %v847, %v877
        %s880 = sld [smem:[#allocation2 + $0x83]]
        %v881 = vstv %s880
        %v882 = vmul.f32 %v881, %v807
        %884 = vrot.lane.b32.xlu0 %v882, 126
        %v885 = vpop.permute.xlu0 %884
        %v887 = vadd.f32 %v855, %v885
        %v888 = vld [vmem:[%s725 + $0x2] sm:$0xff]
        %s889 = sld [smem:[#allocation2 + $0x18]]
        %v890 = vstv %s889
        %v891 = vmul.f32 %v890, %v888
        %v892 = vadd.f32 %v863, %v891
        %s893 = sld [smem:[#allocation2 + $0x3c]]
        %v894 = vstv %s893
        %v895 = vmul.f32 %v894, %v888
        %v896 = vadd.f32 %v871, %v895
        %s897 = sld [smem:[#allocation2 + $0x60]]
        %v898 = vstv %s897
        %v899 = vmul.f32 %v898, %v888
        %v900 = vadd.f32 %v879, %v899
        %s901 = sld [smem:[#allocation2 + $0x84]]
        %v902 = vstv %s901
        %v903 = vmul.f32 %v902, %v888
        %v904 = vadd.f32 %v887, %v903
        %s905 = sld [smem:[#allocation2 + $0x19]]
        %v906 = vstv %s905
        %v907 = vmul.f32 %v906, %v888
        %909 = vrot.lane.b32.xlu0 %v907, 127
        %v910 = vpop.permute.xlu0 %909
        %v912 = vadd.f32 %v892, %v910
        %s913 = sld [smem:[#allocation2 + $0x3d]]
        %v914 = vstv %s913
        %v915 = vmul.f32 %v914, %v888
        %917 = vrot.lane.b32.xlu0 %v915, 127
        %v918 = vpop.permute.xlu0 %917
        %v920 = vadd.f32 %v896, %v918
        %s921 = sld [smem:[#allocation2 + $0x61]]
        %v922 = vstv %s921
        %v923 = vmul.f32 %v922, %v888
        %925 = vrot.lane.b32.xlu0 %v923, 127
        %v926 = vpop.permute.xlu0 %925
        %v928 = vadd.f32 %v900, %v926
        %s929 = sld [smem:[#allocation2 + $0x85]]
        %v930 = vstv %s929
        %v931 = vmul.f32 %v930, %v888
        %933 = vrot.lane.b32.xlu0 %v931, 127
        %v934 = vpop.permute.xlu0 %933
        %v936 = vadd.f32 %v904, %v934
        %s937 = sld [smem:[#allocation2 + $0x1a]]
        %v938 = vstv %s937
        %v939 = vmul.f32 %v938, %v888
        %941 = vrot.lane.b32.xlu0 %v939, 126
        %v942 = vpop.permute.xlu0 %941
        %v944 = vadd.f32 %v912, %v942
        %s945 = sld [smem:[#allocation2 + $0x3e]]
        %v946 = vstv %s945
        %v947 = vmul.f32 %v946, %v888
        %949 = vrot.lane.b32.xlu0 %v947, 126
        %v950 = vpop.permute.xlu0 %949
        %v952 = vadd.f32 %v920, %v950
        %s953 = sld [smem:[#allocation2 + $0x62]]
        %v954 = vstv %s953
        %v955 = vmul.f32 %v954, %v888
        %957 = vrot.lane.b32.xlu0 %v955, 126
        %v958 = vpop.permute.xlu0 %957
        %v960 = vadd.f32 %v928, %v958
        %s961 = sld [smem:[#allocation2 + $0x86]]
        %v962 = vstv %s961
        %v963 = vmul.f32 %v962, %v888
        %965 = vrot.lane.b32.xlu0 %v963, 126
        %v966 = vpop.permute.xlu0 %965
        %v968 = vadd.f32 %v936, %v966
        %s969 = scalar_lea.vmem %s218, 48 [#allocation5]
        %v970 = vld [vmem:[%s969] sm:$0xff]
        %s971 = sld [smem:[#allocation2 + $0x1b]]
        %v972 = vstv %s971
        %v973 = vmul.f32 %v972, %v970
        %v974 = vadd.f32 %v944, %v973
        %s975 = sld [smem:[#allocation2 + $0x3f]]
        %v976 = vstv %s975
        %v977 = vmul.f32 %v976, %v970
        %v978 = vadd.f32 %v952, %v977
        %s979 = sld [smem:[#allocation2 + $0x63]]
        %v980 = vstv %s979
        %v981 = vmul.f32 %v980, %v970
        %v982 = vadd.f32 %v960, %v981
        %s983 = sld [smem:[#allocation2 + $0x87]]
        %v984 = vstv %s983
        %v985 = vmul.f32 %v984, %v970
        %v986 = vadd.f32 %v968, %v985
        %s987 = sld [smem:[#allocation2 + $0x1c]]
        %v988 = vstv %s987
        %v989 = vmul.f32 %v988, %v970
        %991 = vrot.lane.b32.xlu0 %v989, 127
        %v992 = vpop.permute.xlu0 %991
        %v994 = vadd.f32 %v974, %v992
        %s995 = sld [smem:[#allocation2 + $0x40]]
        %v996 = vstv %s995
        %v997 = vmul.f32 %v996, %v970
        %999 = vrot.lane.b32.xlu0 %v997, 127
        %v1000 = vpop.permute.xlu0 %999
        %v1002 = vadd.f32 %v978, %v1000
        %s1003 = sld [smem:[#allocation2 + $0x64]]
        %v1004 = vstv %s1003
        %v1005 = vmul.f32 %v1004, %v970
        %1007 = vrot.lane.b32.xlu0 %v1005, 127
        %v1008 = vpop.permute.xlu0 %1007
        %v1010 = vadd.f32 %v982, %v1008
        %s1011 = sld [smem:[#allocation2 + $0x88]]
        %v1012 = vstv %s1011
        %v1013 = vmul.f32 %v1012, %v970
        %1015 = vrot.lane.b32.xlu0 %v1013, 127
        %v1016 = vpop.permute.xlu0 %1015
        %v1018 = vadd.f32 %v986, %v1016
        %s1019 = sld [smem:[#allocation2 + $0x1d]]
        %v1020 = vstv %s1019
        %v1021 = vmul.f32 %v1020, %v970
        %1023 = vrot.lane.b32.xlu0 %v1021, 126
        %v1024 = vpop.permute.xlu0 %1023
        %v1026 = vadd.f32 %v994, %v1024
        %s1027 = sld [smem:[#allocation2 + $0x41]]
        %v1028 = vstv %s1027
        %v1029 = vmul.f32 %v1028, %v970
        %1031 = vrot.lane.b32.xlu0 %v1029, 126
        %v1032 = vpop.permute.xlu0 %1031
        %v1034 = vadd.f32 %v1002, %v1032
        %s1035 = sld [smem:[#allocation2 + $0x65]]
        %v1036 = vstv %s1035
        %v1037 = vmul.f32 %v1036, %v970
        %1039 = vrot.lane.b32.xlu0 %v1037, 126
        %v1040 = vpop.permute.xlu0 %1039
        %v1042 = vadd.f32 %v1010, %v1040
        %s1043 = sld [smem:[#allocation2 + $0x89]]
        %v1044 = vstv %s1043
        %v1045 = vmul.f32 %v1044, %v970
        %1047 = vrot.lane.b32.xlu0 %v1045, 126
        %v1048 = vpop.permute.xlu0 %1047
        %v1050 = vadd.f32 %v1018, %v1048
        %v1051 = vld [vmem:[%s969 + $0x1] sm:$0xff]
        %s1052 = sld [smem:[#allocation2 + $0x1e]]
        %v1053 = vstv %s1052
        %v1054 = vmul.f32 %v1053, %v1051
        %v1055 = vadd.f32 %v1026, %v1054
        %s1056 = sld [smem:[#allocation2 + $0x42]]
        %v1057 = vstv %s1056
        %v1058 = vmul.f32 %v1057, %v1051
        %v1059 = vadd.f32 %v1034, %v1058
        %s1060 = sld [smem:[#allocation2 + $0x66]]
        %v1061 = vstv %s1060
        %v1062 = vmul.f32 %v1061, %v1051
        %v1063 = vadd.f32 %v1042, %v1062
        %s1064 = sld [smem:[#allocation2 + $0x8a]]
        %v1065 = vstv %s1064
        %v1066 = vmul.f32 %v1065, %v1051
        %v1067 = vadd.f32 %v1050, %v1066
        %s1068 = sld [smem:[#allocation2 + $0x1f]]
        %v1069 = vstv %s1068
        %v1070 = vmul.f32 %v1069, %v1051
        %1072 = vrot.lane.b32.xlu0 %v1070, 127
        %v1073 = vpop.permute.xlu0 %1072
        %v1075 = vadd.f32 %v1055, %v1073
        %s1076 = sld [smem:[#allocation2 + $0x43]]
        %v1077 = vstv %s1076
        %v1078 = vmul.f32 %v1077, %v1051
        %1080 = vrot.lane.b32.xlu0 %v1078, 127
        %v1081 = vpop.permute.xlu0 %1080
        %v1083 = vadd.f32 %v1059, %v1081
        %s1084 = sld [smem:[#allocation2 + $0x67]]
        %v1085 = vstv %s1084
        %v1086 = vmul.f32 %v1085, %v1051
        %1088 = vrot.lane.b32.xlu0 %v1086, 127
        %v1089 = vpop.permute.xlu0 %1088
        %v1091 = vadd.f32 %v1063, %v1089
        %s1092 = sld [smem:[#allocation2 + $0x8b]]
        %v1093 = vstv %s1092
        %v1094 = vmul.f32 %v1093, %v1051
        %1096 = vrot.lane.b32.xlu0 %v1094, 127
        %v1097 = vpop.permute.xlu0 %1096
        %v1099 = vadd.f32 %v1067, %v1097
        %s1100 = sld [smem:[#allocation2 + $0x20]]
        %v1101 = vstv %s1100
        %v1102 = vmul.f32 %v1101, %v1051
        %1104 = vrot.lane.b32.xlu0 %v1102, 126
        %v1105 = vpop.permute.xlu0 %1104
        %v1107 = vadd.f32 %v1075, %v1105
        %s1108 = sld [smem:[#allocation2 + $0x44]]
        %v1109 = vstv %s1108
        %v1110 = vmul.f32 %v1109, %v1051
        %1112 = vrot.lane.b32.xlu0 %v1110, 126
        %v1113 = vpop.permute.xlu0 %1112
        %v1115 = vadd.f32 %v1083, %v1113
        %s1116 = sld [smem:[#allocation2 + $0x68]]
        %v1117 = vstv %s1116
        %v1118 = vmul.f32 %v1117, %v1051
        %1120 = vrot.lane.b32.xlu0 %v1118, 126
        %v1121 = vpop.permute.xlu0 %1120
        %v1123 = vadd.f32 %v1091, %v1121
        %s1124 = sld [smem:[#allocation2 + $0x8c]]
        %v1125 = vstv %s1124
        %v1126 = vmul.f32 %v1125, %v1051
        %1128 = vrot.lane.b32.xlu0 %v1126, 126
        %v1129 = vpop.permute.xlu0 %1128
        %v1131 = vadd.f32 %v1099, %v1129
        %v1132 = vld [vmem:[%s969 + $0x2] sm:$0xff]
        %s1133 = sld [smem:[#allocation2 + $0x21]]
        %v1134 = vstv %s1133
        %v1135 = vmul.f32 %v1134, %v1132
        %v1136 = vadd.f32 %v1107, %v1135
        %s1137 = sld [smem:[#allocation2 + $0x45]]
        %v1138 = vstv %s1137
        %v1139 = vmul.f32 %v1138, %v1132
        %v1140 = vadd.f32 %v1115, %v1139
        %s1141 = sld [smem:[#allocation2 + $0x69]]
        %v1142 = vstv %s1141
        %v1143 = vmul.f32 %v1142, %v1132
        %v1144 = vadd.f32 %v1123, %v1143
        %s1145 = sld [smem:[#allocation2 + $0x8d]]
        %v1146 = vstv %s1145
        %v1147 = vmul.f32 %v1146, %v1132
        %v1148 = vadd.f32 %v1131, %v1147
        %s1149 = sld [smem:[#allocation2 + $0x22]]
        %v1150 = vstv %s1149
        %v1151 = vmul.f32 %v1150, %v1132
        %1153 = vrot.lane.b32.xlu0 %v1151, 127
        %v1154 = vpop.permute.xlu0 %1153
        %v1156 = vadd.f32 %v1136, %v1154
        %s1157 = sld [smem:[#allocation2 + $0x46]]
        %v1158 = vstv %s1157
        %v1159 = vmul.f32 %v1158, %v1132
        %1161 = vrot.lane.b32.xlu0 %v1159, 127
        %v1162 = vpop.permute.xlu0 %1161
        %v1164 = vadd.f32 %v1140, %v1162
        %s1165 = sld [smem:[#allocation2 + $0x6a]]
        %v1166 = vstv %s1165
        %v1167 = vmul.f32 %v1166, %v1132
        %1169 = vrot.lane.b32.xlu0 %v1167, 127
        %v1170 = vpop.permute.xlu0 %1169
        %v1172 = vadd.f32 %v1144, %v1170
        %s1173 = sld [smem:[#allocation2 + $0x8e]]
        %v1174 = vstv %s1173
        %v1175 = vmul.f32 %v1174, %v1132
        %1177 = vrot.lane.b32.xlu0 %v1175, 127
        %v1178 = vpop.permute.xlu0 %1177
        %v1180 = vadd.f32 %v1148, %v1178
        %s1181 = sld [smem:[#allocation2 + $0x23]]
        %v1182 = vstv %s1181
        %v1183 = vmul.f32 %v1182, %v1132
        %1185 = vrot.lane.b32.xlu0 %v1183, 126
        %v1186 = vpop.permute.xlu0 %1185
        %v1188 = vadd.f32 %v1156, %v1186
        %s1189 = sld [smem:[#allocation2 + $0x47]]
        %v1190 = vstv %s1189
        %v1191 = vmul.f32 %v1190, %v1132
        %1193 = vrot.lane.b32.xlu0 %v1191, 126
        %v1194 = vpop.permute.xlu0 %1193
        %v1196 = vadd.f32 %v1164, %v1194
        %s1197 = sld [smem:[#allocation2 + $0x6b]]
        %v1198 = vstv %s1197
        %v1199 = vmul.f32 %v1198, %v1132
        %1201 = vrot.lane.b32.xlu0 %v1199, 126
        %v1202 = vpop.permute.xlu0 %1201
        %v1204 = vadd.f32 %v1172, %v1202
        %s1205 = sld [smem:[#allocation2 + $0x8f]]
        %v1206 = vstv %s1205
        %v1207 = vmul.f32 %v1206, %v1132
        %1209 = vrot.lane.b32.xlu0 %v1207, 126
        %v1210 = vpop.permute.xlu0 %1209
        %v1212 = vadd.f32 %v1180, %v1210
        %vm1213 = vcmask 130048
        %1214 = vst.msk [vmem:[%s237] sm:$0xff] %vm1213, %v1188
        %s1215 = scalar_lea.vmem %s237, 8 [#allocation6]
        %1216 = vst.msk [vmem:[%s1215] sm:$0xff] %vm1213, %v1196
        %s1217 = scalar_lea.vmem %s237, 16 [#allocation6]
        %1218 = vst.msk [vmem:[%s1217] sm:$0xff] %vm1213, %v1204
        %s1219 = scalar_lea.vmem %s237, 24 [#allocation6]
        %1220 = vst.msk [vmem:[%s1219] sm:$0xff] %vm1213, %v1212
        %s1221 = sand.u32 %s88, 1
        %s1222 = scalar_lea.sflag [#allocation3], %s1221
        %s1223 = sand.u32 %s88, 1
        %s1224 = smul.addr %s1223, 32
        %s1225 = scalar_lea.vmem [#allocation6], %s1224
        // Predicated region
        $region71: #{tpu_custom_call.1} parent=61 // pred_check
          %p1226 = pneg %p98
        $region72: #{tpu_custom_call.1} parent=61 // pred_check_branch
          %1228 = sbr.rel (%p1226) target = $region74
        $region73: #{tpu_custom_call.1} parent=61 // pred_region
          %s1230 = ssub.s32 512, 512
          %1231 = vsyncadd %s1222, %s1230
          %s1232 = smul.addr %s21, 8
          %s1233 = sadd.s32 %s22, %s1232
          %s1234 = smul.addr %s1233, 128
          %s1235 = scalar_lea.hbm %s2, %s1234
          %s1236 = sshll.u32 %s1225, 4
          %s1237 = int_to_ptr.vmem [resolvable:$true] %s1236
          %1242 = dma.vmem_to_hbm [thread:$0]  %s1237, 512, %s1235, %s1222, 128, 256, 8
        $region74: #{tpu_custom_call.1} parent=61 // pred_fallthru
          _
      $region62: #{tpu_custom_call.1} parent=5 // pred_fallthru
        _
      %p1243 = scmp.le.s32.totalorder 2, %s12
      // Predicated region
      $region75: #{tpu_custom_call.1} parent=5 // pred_check
        %p1244 = pneg %p1243
      $region76: #{tpu_custom_call.1} parent=5 // pred_check_branch
        %1246 = sbr.rel (%p1244) target = $region78
      $region77: #{tpu_custom_call.1} parent=5 // pred_region
        %s1247 = ssub.s32 %s12, 2
        // Predicated region
        $region79: #{tpu_custom_call.1} parent=77 // pred_check
          %p1248 = pneg %p104
        $region80: #{tpu_custom_call.1} parent=77 // pred_check_branch
          %1250 = sbr.rel (%p1248) target = $region82
        $region81: #{tpu_custom_call.1} parent=77 // pred_region
          %s1251 = sand.u32 %s89, 1
          %s1252 = scalar_lea.sflag [#allocation3], %s1251
          %s1253 = sand.u32 %s89, 1
          %s1254 = smul.addr %s1253, 32
          %s1255 = scalar_lea.vmem [#allocation6], %s1254
          %1256 = dma.done %s1252, 512
        $region82: #{tpu_custom_call.1} parent=77 // pred_fallthru
          _
      $region78: #{tpu_custom_call.1} parent=5 // pred_fallthru
        _
    $region6: #{tpu_custom_call.1} parent=1 // loop_footer
      %s16 = sadd.s32 1, %s12
    $region7: #{tpu_custom_call.1} parent=1 // loop_footer_branch
      %11 = sbr.rel target = $region3
    $region8: #{tpu_custom_call.1} parent=1 // loop_exit
      _
    %1257 = vsyncpa [#allocation3], 1
    %s1258 = scalar_lea.sflag [#allocation3], 1
    %1259 = vsyncpa %s1258, 1
    %1260 = vsyncpa [#allocation4], 1
    %s1261 = scalar_lea.sflag [#allocation4], 1
    %1262 = vsyncpa %s1261, 1

</llo_original>
